<compile_context>
chip_gen: v7x
topology: tpu7x:2x2x1
jax: 0.10.0
libtpu: 0.0.40
codegen_flags: <defaults>
</compile_context>

<pallas_src>
import functools

import jax
import jax.numpy as jnp
from jax import lax
from jax.experimental import pallas as pl
from jax.experimental.pallas import tpu as pltpu


def _round_up(x, m):
    return ((x + m - 1) // m) * m


def _lstm_recurrence_kernel(xp_ref, whhT_ref, h0_ref, c0_ref,
                            out_ref, hN_ref, cN_ref,
                            h_scr, c_scr):
    """One grid step processes (one batch block) x (one block of T_blk steps).

    xp_ref  : (T_blk, Bb, 4Hp)  precomputed X @ W_ih^T + (b_ih + b_hh), padded
    whhT_ref: (Hp, 4Hp)         per-gate lane-padded recurrent weight
    h0/c0   : (1, Bb, Hp)       initial state (read only on first time block)
    out_ref : (T_blk, Bb, Hp)   lstm_out block
    hN/cN   : (1, Bb, Hp)       final state (written only on last time block)
    h_scr/c_scr: (Bb, Hp) f32   recurrence carry across time blocks
    """
    t_idx = pl.program_id(1)

    # Load the initial state into the resident VMEM carry on the first
    # time block of each batch block.
    @pl.when(t_idx == 0)
    def _():
        h_scr[...] = h0_ref[0].astype(jnp.float32)
        c_scr[...] = c0_ref[0].astype(jnp.float32)

    t_blk = xp_ref.shape[0]
    hp = h_scr.shape[-1]

    # Hoist the (constant within this block) recurrent weight out of the loop.
    whhT = whhT_ref[...]                               # (Hp, 4Hp)
    mxu_dtype = whhT.dtype

    def step(t, carry):
        h, c = carry
        # gates = x_proj[t] + h @ W_hh^T    -> (Bb, 4Hp); x-projection + bias
        # were hoisted to the wrapper.  f32 accumulation on the MXU.
        gates = xp_ref[t].astype(jnp.float32) + jnp.dot(
            h.astype(mxu_dtype), whhT, preferred_element_type=jnp.float32)

        # PyTorch gate order: i, f, g, o.  With Hp a multiple of 128 each
        # slice is lane-aligned and lane-dense (no masked sub-vreg slicing).
        i_g = jax.nn.sigmoid(gates[:, 0 * hp:1 * hp])
        f_g = jax.nn.sigmoid(gates[:, 1 * hp:2 * hp])
        g_g = jnp.tanh(gates[:, 2 * hp:3 * hp])
        o_g = jax.nn.sigmoid(gates[:, 3 * hp:4 * hp])

        c_new = f_g * c + i_g * g_g
        h_new = o_g * jnp.tanh(c_new)

        # Lane-dense (Bb, Hp) store -> unmasked vst.
        out_ref[t] = h_new.astype(out_ref.dtype)
        return (h_new, c_new)

    # Serial time recurrence; unroll capped (true dependence chain on h/c,
    # so large unroll only costs vregs/code size).
    unroll = t_blk if t_blk <= 8 else 8
    h_fin, c_fin = lax.fori_loop(0, t_blk, step,
                                 (h_scr[...], c_scr[...]), unroll=unroll)

    h_scr[...] = h_fin
    c_scr[...] = c_fin

    # Final state written exactly once, on the last time block.
    @pl.when(t_idx == pl.num_programs(1) - 1)
    def _():
        hN_ref[0] = h_fin.astype(hN_ref.dtype)
        cN_ref[0] = c_fin.astype(cN_ref.dtype)


def _pad_gate_cols(w, h, hp):
    """Pad a gate-stacked last dim (..., 4h) -> (..., 4hp), zeros per gate."""
    if h == hp:
        return w
    parts = jnp.split(w, 4, axis=-1)
    pad = [(0, 0)] * (w.ndim - 1) + [(0, hp - h)]
    return jnp.concatenate([jnp.pad(p, pad) for p in parts], axis=-1)


def fact_encoder_forward(X, hidden_state, params, *, t_block=None,
                         mxu_dtype=jnp.float32):
    """X: (T, B, D) float32.  hidden_state = (h0, c0), each (1, B, H).
    params = (w_ih, w_hh, b_ih, b_hh) with shapes (4H,D), (4H,H), (4H,), (4H,).
    Returns (lstm_out (T, B, H), (h_n, c_n))."""
    h0, c0 = hidden_state
    w_ih, w_hh, b_ih, b_hh = params
    T, B, D = X.shape
    H = h0.shape[-1]

    # --- Lane/sublane padding ------------------------------------------------
    Hp = _round_up(H, 128)          # lane-dense gate slices & output stores
    Bp = _round_up(B, 8)            # sublane-aligned batch

    if t_block is None:
        t_block = T                 # toy sizes: whole sequence in one block
    assert T % t_block == 0, "t_block must divide T"
    num_t_blocks = T // t_block

    b_block = Bp                    # one batch block at toy sizes
    # TODO(synk): for large B, shrink b_block and rely on the "parallel"
    # batch grid axis to shard across v7x's two TensorCores.
    num_b_blocks = Bp // b_block

    f32 = jnp.float32

    # Per-gate padded weights/bias.  Padded gate columns are all-zero, padded
    # rows of W_hh^T are all-zero, so padded lanes of h/c stay exactly 0 and
    # never perturb the real lanes.
    wihT_p = _pad_gate_cols(w_ih.astype(f32).T, H, Hp)             # (D, 4Hp)
    whhT_p = _pad_gate_cols(w_hh.astype(f32).T, H, Hp)             # (H, 4Hp)
    whhT_p = jnp.pad(whhT_p, ((0, Hp - H), (0, 0)))                # (Hp, 4Hp)
    bias_p = _pad_gate_cols((b_ih + b_hh).astype(f32)[None, :], H, Hp)  # (1,4Hp)

    # --- Hoisted input projection (no time dependence) ----------------------
    x_proj = (X.reshape(T * B, D).astype(f32) @ wihT_p + bias_p
              ).reshape(T, B, 4 * Hp)
    if Bp != B:
        x_proj = jnp.pad(x_proj, ((0, 0), (0, Bp - B), (0, 0)))
    # TODO(synk): keep x_proj in bf16 on v6e/v7x to halve the HBM round trip.

    h0_p = jnp.pad(h0.astype(f32), ((0, 0), (0, Bp - B), (0, Hp - H)))
    c0_p = jnp.pad(c0.astype(f32), ((0, 0), (0, Bp - B), (0, Hp - H)))

    # --- VMEM budget (double-buffered x_proj/out + weight + states) ---------
    blk_bytes = (2 * t_block * b_block * 4 * Hp * 4
                 + 2 * t_block * b_block * Hp * 4
                 + 2 * Hp * 4 * Hp * jnp.dtype(mxu_dtype).itemsize
                 + 8 * b_block * Hp * 4)
    vmem_limit = int(min(96 * 1024 * 1024,
                         max(32 * 1024 * 1024, 2 * blk_bytes)))

    grid_spec = pltpu.PrefetchScalarGridSpec(
        num_scalar_prefetch=0,
        grid=(num_b_blocks, num_t_blocks),
        in_specs=[
            pl.BlockSpec((t_block, b_block, 4 * Hp), lambda b, t: (t, b, 0)),
            pl.BlockSpec((Hp, 4 * Hp), lambda b, t: (0, 0)),        # W_hh^T
            pl.BlockSpec((1, b_block, Hp), lambda b, t: (0, b, 0)),  # h0
            pl.BlockSpec((1, b_block, Hp), lambda b, t: (0, b, 0)),  # c0
        ],
        out_specs=[
            pl.BlockSpec((t_block, b_block, Hp), lambda b, t: (t, b, 0)),
            pl.BlockSpec((1, b_block, Hp), lambda b, t: (0, b, 0)),  # h_n
            pl.BlockSpec((1, b_block, Hp), lambda b, t: (0, b, 0)),  # c_n
        ],
        scratch_shapes=[
            pltpu.VMEM((b_block, Hp), jnp.float32),   # h carry
            pltpu.VMEM((b_block, Hp), jnp.float32),   # c carry
        ],
    )

    out_p, h_n_p, c_n_p = pl.pallas_call(
        _lstm_recurrence_kernel,
        out_shape=(
            jax.ShapeDtypeStruct((T, Bp, Hp), jnp.float32),
            jax.ShapeDtypeStruct((1, Bp, Hp), jnp.float32),
            jax.ShapeDtypeStruct((1, Bp, Hp), jnp.float32),
        ),
        grid_spec=grid_spec,
        compiler_params=pltpu.CompilerParams(
            # batch blocks independent (megacore-shardable on v7x);
            # time axis carries the recurrence -> arbitrary.
            dimension_semantics=("parallel", "arbitrary"),
            vmem_limit_bytes=vmem_limit),
    )(x_proj, whhT_p.astype(mxu_dtype), h0_p, c0_p)

    # Slice padding back off.
    lstm_out = out_p[:, :B, :H]
    h_n = h_n_p[:, :B, :H]
    c_n = c_n_p[:, :B, :H]
    return lstm_out, (h_n, c_n)


def _reference_lstm(X, hidden_state, params):
    """Pure-JAX reference of torch.nn.LSTM forward (1 layer)."""
    h0, c0 = hidden_state
    w_ih, w_hh, b_ih, b_hh = params
    H = h0.shape[-1]

    def step(carry, x_t):
        h, c = carry
        gates = x_t @ w_ih.T + b_ih + h @ w_hh.T + b_hh
        i = jax.nn.sigmoid(gates[:, 0 * H:1 * H])
        f = jax.nn.sigmoid(gates[:, 1 * H:2 * H])
        g = jnp.tanh(gates[:, 2 * H:3 * H])
        o = jax.nn.sigmoid(gates[:, 3 * H:4 * H])
        c_new = f * c + i * g
        h_new = o * jnp.tanh(c_new)
        return (h_new, c_new), h_new

    (h_n, c_n), ys = jax.lax.scan(step, (h0[0], c0[0]), X)
    return ys, (h_n[None], c_n[None])


if __name__ == "__main__":
    # Small shapes consistent with the module.
    T, B, D, H = 8, 8, 32, 32          # seq_len, batch, input_dim, output_dim

    key = jax.random.PRNGKey(0)
    k_x, k1, k2, k3, k4 = jax.random.split(key, 5)

    # Deterministic parameter init, PyTorch-style U(-1/sqrt(H), 1/sqrt(H)).
    bound = 1.0 / jnp.sqrt(jnp.float32(H))
    w_ih = jax.random.uniform(k1, (4 * H, D), jnp.float32, -bound, bound)
    w_hh = jax.random.uniform(k2, (4 * H, H), jnp.float32, -bound, bound)
    b_ih = jax.random.uniform(k3, (4 * H,), jnp.float32, -bound, bound)
    b_hh = jax.random.uniform(k4, (4 * H,), jnp.float32, -bound, bound)
    params = (w_ih, w_hh, b_ih, b_hh)

    X = jax.random.normal(k_x, (T, B, D), jnp.float32)
    # initHidden(batch_size): zeros for (h0, c0), shape (num_layers, B, H).
    h0 = jnp.zeros((1, B, H), jnp.float32)
    c0 = jnp.zeros((1, B, H), jnp.float32)

    fwd = functools.partial(fact_encoder_forward, t_block=T)
    lstm_out, (h_n, c_n) = fwd(X, (h0, c0), params)
    jax.block_until_ready((lstm_out, h_n, c_n))

    # Verify against pure-JAX reference of the PyTorch LSTM semantics.
    ref_out, (ref_h, ref_c) = _reference_lstm(X, (h0, c0), params)
    assert jnp.allclose(lstm_out, ref_out, atol=1e-5, rtol=1e-5)
    assert jnp.allclose(h_n, ref_h, atol=1e-5, rtol=1e-5)
    assert jnp.allclose(c_n, ref_c, atol=1e-5, rtol=1e-5)

    print("KERNEL_OK")
</pallas_src>

<mosaic_0001>
module attributes {stable_mosaic.version = 11 : i64} {
  func.func @_lstm_recurrence_kernel(%arg0: i32, %arg1: i32, %arg2: memref<8x8x512xf32, #tpu.memory_space<vmem>>, %arg3: memref<128x512xf32, #tpu.memory_space<vmem>>, %arg4: memref<1x8x128xf32, #tpu.memory_space<vmem>>, %arg5: memref<1x8x128xf32, #tpu.memory_space<vmem>>, %arg6: memref<8x8x128xf32, #tpu.memory_space<vmem>>, %arg7: memref<1x8x128xf32, #tpu.memory_space<vmem>>, %arg8: memref<1x8x128xf32, #tpu.memory_space<vmem>>, %arg9: memref<8x128xf32, #tpu.memory_space<vmem>>, %arg10: memref<8x128xf32, #tpu.memory_space<vmem>>) attributes {dimension_semantics = [#tpu.dimension_semantics<parallel>, #tpu.dimension_semantics<arbitrary>], iteration_bounds = array<i64: 1, 1>, scalar_prefetch = 0 : i64, scratch_operands = 2 : i64, tpu.core_type = #tpu.core_type<tc>, window_params = [{transform_indices = @transform_0, window_bounds = array<i64: 8, 8, 512>}, {pipeline_mode = #tpu.pipeline_mode<synchronous>, transform_indices = @transform_1, window_bounds = array<i64: 128, 512>}, {transform_indices = @transform_2, window_bounds = array<i64: 1, 8, 128>}, {transform_indices = @transform_3, window_bounds = array<i64: 1, 8, 128>}, {transform_indices = @transform_4, window_bounds = array<i64: 8, 8, 128>}, {transform_indices = @transform_5, window_bounds = array<i64: 1, 8, 128>}, {transform_indices = @transform_6, window_bounds = array<i64: 1, 8, 128>}]} {
    %c0_i32 = arith.constant 0 : i32
    %0 = arith.cmpi eq, %arg1, %c0_i32 : i32
    %1 = arith.extui %0 : i1 to i32
    %c0_i32_0 = arith.constant 0 : i32
    %2 = arith.cmpi ne, %1, %c0_i32_0 : i32
    scf.if %2 {
      %c0_76 = arith.constant 0 : index
      %c0_77 = arith.constant 0 : index
      %c0_78 = arith.constant 0 : index
      %283 = vector.load %arg4[%c0_76, %c0_77, %c0_78] : memref<1x8x128xf32, #tpu.memory_space<vmem>>, vector<1x8x128xf32>
      %284 = vector.shape_cast %283 : vector<1x8x128xf32> to vector<8x128xf32>
      %c0_79 = arith.constant 0 : index
      %c0_80 = arith.constant 0 : index
      %285 = vector.load %arg9[%c0_79, %c0_80] : memref<8x128xf32, #tpu.memory_space<vmem>>, vector<8x128xf32>
      tpu.vector_store %arg9[%c0_79, %c0_80], %284 {strides = array<i32>} : memref<8x128xf32, #tpu.memory_space<vmem>>, vector<8x128xf32>,
      %c0_81 = arith.constant 0 : index
      %c0_82 = arith.constant 0 : index
      %c0_83 = arith.constant 0 : index
      %286 = vector.load %arg5[%c0_81, %c0_82, %c0_83] : memref<1x8x128xf32, #tpu.memory_space<vmem>>, vector<1x8x128xf32>
      %287 = vector.shape_cast %286 : vector<1x8x128xf32> to vector<8x128xf32>
      %c0_84 = arith.constant 0 : index
      %c0_85 = arith.constant 0 : index
      %288 = vector.load %arg10[%c0_84, %c0_85] : memref<8x128xf32, #tpu.memory_space<vmem>>, vector<8x128xf32>
      tpu.vector_store %arg10[%c0_84, %c0_85], %287 {strides = array<i32>} : memref<8x128xf32, #tpu.memory_space<vmem>>, vector<8x128xf32>,
    } else {
    }
    %c0 = arith.constant 0 : index
    %c0_1 = arith.constant 0 : index
    %3 = vector.load %arg3[%c0, %c0_1] : memref<128x512xf32, #tpu.memory_space<vmem>>, vector<128x512xf32>
    %c0_2 = arith.constant 0 : index
    %c0_3 = arith.constant 0 : index
    %4 = vector.load %arg9[%c0_2, %c0_3] : memref<8x128xf32, #tpu.memory_space<vmem>>, vector<8x128xf32>
    %c0_4 = arith.constant 0 : index
    %c0_5 = arith.constant 0 : index
    %5 = vector.load %arg10[%c0_4, %c0_5] : memref<8x128xf32, #tpu.memory_space<vmem>>, vector<8x128xf32>
    %c0_i32_6 = arith.constant 0 : i32
    %6 = arith.index_cast %c0_i32_6 : i32 to index
    %c0_7 = arith.constant 0 : index
    %c0_8 = arith.constant 0 : index
    %7 = vector.load %arg2[%6, %c0_7, %c0_8] : memref<8x8x512xf32, #tpu.memory_space<vmem>>, vector<1x8x512xf32>
    %8 = vector.shape_cast %7 : vector<1x8x512xf32> to vector<8x512xf32>
    %cst = arith.constant dense<0.000000e+00> : vector<8x512xf32>
    %9 = tpu.matmul %4, %3, %cst {dimension_numbers = #tpu.dot_dimension_numbers<[1], [0], [0], [1], [0, 0, 1, 1], [], []>} : vector<8x128xf32>, vector<128x512xf32>, vector<8x512xf32> -> vector<8x512xf32>
    %10 = arith.addf %8, %9 : vector<8x512xf32>
    %11 = vector.extract_strided_slice %10 {offsets = [0, 0], sizes = [8, 128], strides = [1, 1]} : vector<8x512xf32> to vector<8x128xf32>
    %12 = arith.negf %11 : vector<8x128xf32>
    %13 = math.exp %12 : vector<8x128xf32>
    %cst_9 = arith.constant 1.000000e+00 : f32
    %14 = vector.broadcast %cst_9 : f32 to vector<8x128xf32>
    %15 = arith.addf %14, %13 : vector<8x128xf32>
    %16 = arith.divf %14, %15 : vector<8x128xf32>
    %17 = vector.extract_strided_slice %10 {offsets = [0, 128], sizes = [8, 128], strides = [1, 1]} : vector<8x512xf32> to vector<8x128xf32>
    %18 = arith.negf %17 : vector<8x128xf32>
    %19 = math.exp %18 : vector<8x128xf32>
    %cst_10 = arith.constant 1.000000e+00 : f32
    %20 = vector.broadcast %cst_10 : f32 to vector<8x128xf32>
    %21 = arith.addf %20, %19 : vector<8x128xf32>
    %22 = arith.divf %20, %21 : vector<8x128xf32>
    %23 = vector.extract_strided_slice %10 {offsets = [0, 256], sizes = [8, 128], strides = [1, 1]} : vector<8x512xf32> to vector<8x128xf32>
    %24 = math.tanh %23 : vector<8x128xf32>
    %25 = vector.extract_strided_slice %10 {offsets = [0, 384], sizes = [8, 128], strides = [1, 1]} : vector<8x512xf32> to vector<8x128xf32>
    %26 = arith.negf %25 : vector<8x128xf32>
    %27 = math.exp %26 : vector<8x128xf32>
    %cst_11 = arith.constant 1.000000e+00 : f32
    %28 = vector.broadcast %cst_11 : f32 to vector<8x128xf32>
    %29 = arith.addf %28, %27 : vector<8x128xf32>
    %30 = arith.divf %28, %29 : vector<8x128xf32>
    %31 = arith.mulf %22, %5 : vector<8x128xf32>
    %32 = arith.mulf %16, %24 : vector<8x128xf32>
    %33 = arith.addf %31, %32 : vector<8x128xf32>
    %34 = math.tanh %33 : vector<8x128xf32>
    %35 = arith.mulf %30, %34 : vector<8x128xf32>
    %36 = arith.index_cast %c0_i32_6 : i32 to index
    %c0_12 = arith.constant 0 : index
    %c0_13 = arith.constant 0 : index
    %37 = vector.load %arg6[%36, %c0_12, %c0_13] : memref<8x8x128xf32, #tpu.memory_space<vmem>>, vector<1x8x128xf32>
    %38 = vector.shape_cast %37 : vector<1x8x128xf32> to vector<8x128xf32>
    %39 = vector.shape_cast %35 : vector<8x128xf32> to vector<1x8x128xf32>
    tpu.vector_store %arg6[%36, %c0_12, %c0_13], %39 {strides = array<i32>} : memref<8x8x128xf32, #tpu.memory_space<vmem>>, vector<1x8x128xf32>,
    %c1_i32 = arith.constant 1 : i32
    %40 = arith.index_cast %c1_i32 : i32 to index
    %c0_14 = arith.constant 0 : index
    %c0_15 = arith.constant 0 : index
    %41 = vector.load %arg2[%40, %c0_14, %c0_15] : memref<8x8x512xf32, #tpu.memory_space<vmem>>, vector<1x8x512xf32>
    %42 = vector.shape_cast %41 : vector<1x8x512xf32> to vector<8x512xf32>
    %cst_16 = arith.constant dense<0.000000e+00> : vector<8x512xf32>
    %43 = tpu.matmul %35, %3, %cst_16 {dimension_numbers = #tpu.dot_dimension_numbers<[1], [0], [0], [1], [0, 0, 1, 1], [], []>} : vector<8x128xf32>, vector<128x512xf32>, vector<8x512xf32> -> vector<8x512xf32>
    %44 = arith.addf %42, %43 : vector<8x512xf32>
    %45 = vector.extract_strided_slice %44 {offsets = [0, 0], sizes = [8, 128], strides = [1, 1]} : vector<8x512xf32> to vector<8x128xf32>
    %46 = arith.negf %45 : vector<8x128xf32>
    %47 = math.exp %46 : vector<8x128xf32>
    %cst_17 = arith.constant 1.000000e+00 : f32
    %48 = vector.broadcast %cst_17 : f32 to vector<8x128xf32>
    %49 = arith.addf %48, %47 : vector<8x128xf32>
    %50 = arith.divf %48, %49 : vector<8x128xf32>
    %51 = vector.extract_strided_slice %44 {offsets = [0, 128], sizes = [8, 128], strides = [1, 1]} : vector<8x512xf32> to vector<8x128xf32>
    %52 = arith.negf %51 : vector<8x128xf32>
    %53 = math.exp %52 : vector<8x128xf32>
    %cst_18 = arith.constant 1.000000e+00 : f32
    %54 = vector.broadcast %cst_18 : f32 to vector<8x128xf32>
    %55 = arith.addf %54, %53 : vector<8x128xf32>
    %56 = arith.divf %54, %55 : vector<8x128xf32>
    %57 = vector.extract_strided_slice %44 {offsets = [0, 256], sizes = [8, 128], strides = [1, 1]} : vector<8x512xf32> to vector<8x128xf32>
    %58 = math.tanh %57 : vector<8x128xf32>
    %59 = vector.extract_strided_slice %44 {offsets = [0, 384], sizes = [8, 128], strides = [1, 1]} : vector<8x512xf32> to vector<8x128xf32>
    %60 = arith.negf %59 : vector<8x128xf32>
    %61 = math.exp %60 : vector<8x128xf32>
    %cst_19 = arith.constant 1.000000e+00 : f32
    %62 = vector.broadcast %cst_19 : f32 to vector<8x128xf32>
    %63 = arith.addf %62, %61 : vector<8x128xf32>
    %64 = arith.divf %62, %63 : vector<8x128xf32>
    %65 = arith.mulf %56, %33 : vector<8x128xf32>
    %66 = arith.mulf %50, %58 : vector<8x128xf32>
    %67 = arith.addf %65, %66 : vector<8x128xf32>
    %68 = math.tanh %67 : vector<8x128xf32>
    %69 = arith.mulf %64, %68 : vector<8x128xf32>
    %70 = arith.index_cast %c1_i32 : i32 to index
    %c0_20 = arith.constant 0 : index
    %c0_21 = arith.constant 0 : index
    %71 = vector.load %arg6[%70, %c0_20, %c0_21] : memref<8x8x128xf32, #tpu.memory_space<vmem>>, vector<1x8x128xf32>
    %72 = vector.shape_cast %71 : vector<1x8x128xf32> to vector<8x128xf32>
    %73 = vector.shape_cast %69 : vector<8x128xf32> to vector<1x8x128xf32>
    tpu.vector_store %arg6[%70, %c0_20, %c0_21], %73 {strides = array<i32>} : memref<8x8x128xf32, #tpu.memory_space<vmem>>, vector<1x8x128xf32>,
    %c2_i32 = arith.constant 2 : i32
    %74 = arith.index_cast %c2_i32 : i32 to index
    %c0_22 = arith.constant 0 : index
    %c0_23 = arith.constant 0 : index
    %75 = vector.load %arg2[%74, %c0_22, %c0_23] : memref<8x8x512xf32, #tpu.memory_space<vmem>>, vector<1x8x512xf32>
    %76 = vector.shape_cast %75 : vector<1x8x512xf32> to vector<8x512xf32>
    %cst_24 = arith.constant dense<0.000000e+00> : vector<8x512xf32>
    %77 = tpu.matmul %69, %3, %cst_24 {dimension_numbers = #tpu.dot_dimension_numbers<[1], [0], [0], [1], [0, 0, 1, 1], [], []>} : vector<8x128xf32>, vector<128x512xf32>, vector<8x512xf32> -> vector<8x512xf32>
    %78 = arith.addf %76, %77 : vector<8x512xf32>
    %79 = vector.extract_strided_slice %78 {offsets = [0, 0], sizes = [8, 128], strides = [1, 1]} : vector<8x512xf32> to vector<8x128xf32>
    %80 = arith.negf %79 : vector<8x128xf32>
    %81 = math.exp %80 : vector<8x128xf32>
    %cst_25 = arith.constant 1.000000e+00 : f32
    %82 = vector.broadcast %cst_25 : f32 to vector<8x128xf32>
    %83 = arith.addf %82, %81 : vector<8x128xf32>
    %84 = arith.divf %82, %83 : vector<8x128xf32>
    %85 = vector.extract_strided_slice %78 {offsets = [0, 128], sizes = [8, 128], strides = [1, 1]} : vector<8x512xf32> to vector<8x128xf32>
    %86 = arith.negf %85 : vector<8x128xf32>
    %87 = math.exp %86 : vector<8x128xf32>
    %cst_26 = arith.constant 1.000000e+00 : f32
    %88 = vector.broadcast %cst_26 : f32 to vector<8x128xf32>
    %89 = arith.addf %88, %87 : vector<8x128xf32>
    %90 = arith.divf %88, %89 : vector<8x128xf32>
    %91 = vector.extract_strided_slice %78 {offsets = [0, 256], sizes = [8, 128], strides = [1, 1]} : vector<8x512xf32> to vector<8x128xf32>
    %92 = math.tanh %91 : vector<8x128xf32>
    %93 = vector.extract_strided_slice %78 {offsets = [0, 384], sizes = [8, 128], strides = [1, 1]} : vector<8x512xf32> to vector<8x128xf32>
    %94 = arith.negf %93 : vector<8x128xf32>
    %95 = math.exp %94 : vector<8x128xf32>
    %cst_27 = arith.constant 1.000000e+00 : f32
    %96 = vector.broadcast %cst_27 : f32 to vector<8x128xf32>
    %97 = arith.addf %96, %95 : vector<8x128xf32>
    %98 = arith.divf %96, %97 : vector<8x128xf32>
    %99 = arith.mulf %90, %67 : vector<8x128xf32>
    %100 = arith.mulf %84, %92 : vector<8x128xf32>
    %101 = arith.addf %99, %100 : vector<8x128xf32>
    %102 = math.tanh %101 : vector<8x128xf32>
    %103 = arith.mulf %98, %102 : vector<8x128xf32>
    %104 = arith.index_cast %c2_i32 : i32 to index
    %c0_28 = arith.constant 0 : index
    %c0_29 = arith.constant 0 : index
    %105 = vector.load %arg6[%104, %c0_28, %c0_29] : memref<8x8x128xf32, #tpu.memory_space<vmem>>, vector<1x8x128xf32>
    %106 = vector.shape_cast %105 : vector<1x8x128xf32> to vector<8x128xf32>
    %107 = vector.shape_cast %103 : vector<8x128xf32> to vector<1x8x128xf32>
    tpu.vector_store %arg6[%104, %c0_28, %c0_29], %107 {strides = array<i32>} : memref<8x8x128xf32, #tpu.memory_space<vmem>>, vector<1x8x128xf32>,
    %c3_i32 = arith.constant 3 : i32
    %108 = arith.index_cast %c3_i32 : i32 to index
    %c0_30 = arith.constant 0 : index
    %c0_31 = arith.constant 0 : index
    %109 = vector.load %arg2[%108, %c0_30, %c0_31] : memref<8x8x512xf32, #tpu.memory_space<vmem>>, vector<1x8x512xf32>
    %110 = vector.shape_cast %109 : vector<1x8x512xf32> to vector<8x512xf32>
    %cst_32 = arith.constant dense<0.000000e+00> : vector<8x512xf32>
    %111 = tpu.matmul %103, %3, %cst_32 {dimension_numbers = #tpu.dot_dimension_numbers<[1], [0], [0], [1], [0, 0, 1, 1], [], []>} : vector<8x128xf32>, vector<128x512xf32>, vector<8x512xf32> -> vector<8x512xf32>
    %112 = arith.addf %110, %111 : vector<8x512xf32>
    %113 = vector.extract_strided_slice %112 {offsets = [0, 0], sizes = [8, 128], strides = [1, 1]} : vector<8x512xf32> to vector<8x128xf32>
    %114 = arith.negf %113 : vector<8x128xf32>
    %115 = math.exp %114 : vector<8x128xf32>
    %cst_33 = arith.constant 1.000000e+00 : f32
    %116 = vector.broadcast %cst_33 : f32 to vector<8x128xf32>
    %117 = arith.addf %116, %115 : vector<8x128xf32>
    %118 = arith.divf %116, %117 : vector<8x128xf32>
    %119 = vector.extract_strided_slice %112 {offsets = [0, 128], sizes = [8, 128], strides = [1, 1]} : vector<8x512xf32> to vector<8x128xf32>
    %120 = arith.negf %119 : vector<8x128xf32>
    %121 = math.exp %120 : vector<8x128xf32>
    %cst_34 = arith.constant 1.000000e+00 : f32
    %122 = vector.broadcast %cst_34 : f32 to vector<8x128xf32>
    %123 = arith.addf %122, %121 : vector<8x128xf32>
    %124 = arith.divf %122, %123 : vector<8x128xf32>
    %125 = vector.extract_strided_slice %112 {offsets = [0, 256], sizes = [8, 128], strides = [1, 1]} : vector<8x512xf32> to vector<8x128xf32>
    %126 = math.tanh %125 : vector<8x128xf32>
    %127 = vector.extract_strided_slice %112 {offsets = [0, 384], sizes = [8, 128], strides = [1, 1]} : vector<8x512xf32> to vector<8x128xf32>
    %128 = arith.negf %127 : vector<8x128xf32>
    %129 = math.exp %128 : vector<8x128xf32>
    %cst_35 = arith.constant 1.000000e+00 : f32
    %130 = vector.broadcast %cst_35 : f32 to vector<8x128xf32>
    %131 = arith.addf %130, %129 : vector<8x128xf32>
    %132 = arith.divf %130, %131 : vector<8x128xf32>
    %133 = arith.mulf %124, %101 : vector<8x128xf32>
    %134 = arith.mulf %118, %126 : vector<8x128xf32>
    %135 = arith.addf %133, %134 : vector<8x128xf32>
    %136 = math.tanh %135 : vector<8x128xf32>
    %137 = arith.mulf %132, %136 : vector<8x128xf32>
    %138 = arith.index_cast %c3_i32 : i32 to index
    %c0_36 = arith.constant 0 : index
    %c0_37 = arith.constant 0 : index
    %139 = vector.load %arg6[%138, %c0_36, %c0_37] : memref<8x8x128xf32, #tpu.memory_space<vmem>>, vector<1x8x128xf32>
    %140 = vector.shape_cast %139 : vector<1x8x128xf32> to vector<8x128xf32>
    %141 = vector.shape_cast %137 : vector<8x128xf32> to vector<1x8x128xf32>
    tpu.vector_store %arg6[%138, %c0_36, %c0_37], %141 {strides = array<i32>} : memref<8x8x128xf32, #tpu.memory_space<vmem>>, vector<1x8x128xf32>,
    %c4_i32 = arith.constant 4 : i32
    %142 = arith.index_cast %c4_i32 : i32 to index
    %c0_38 = arith.constant 0 : index
    %c0_39 = arith.constant 0 : index
    %143 = vector.load %arg2[%142, %c0_38, %c0_39] : memref<8x8x512xf32, #tpu.memory_space<vmem>>, vector<1x8x512xf32>
    %144 = vector.shape_cast %143 : vector<1x8x512xf32> to vector<8x512xf32>
    %cst_40 = arith.constant dense<0.000000e+00> : vector<8x512xf32>
    %145 = tpu.matmul %137, %3, %cst_40 {dimension_numbers = #tpu.dot_dimension_numbers<[1], [0], [0], [1], [0, 0, 1, 1], [], []>} : vector<8x128xf32>, vector<128x512xf32>, vector<8x512xf32> -> vector<8x512xf32>
    %146 = arith.addf %144, %145 : vector<8x512xf32>
    %147 = vector.extract_strided_slice %146 {offsets = [0, 0], sizes = [8, 128], strides = [1, 1]} : vector<8x512xf32> to vector<8x128xf32>
    %148 = arith.negf %147 : vector<8x128xf32>
    %149 = math.exp %148 : vector<8x128xf32>
    %cst_41 = arith.constant 1.000000e+00 : f32
    %150 = vector.broadcast %cst_41 : f32 to vector<8x128xf32>
    %151 = arith.addf %150, %149 : vector<8x128xf32>
    %152 = arith.divf %150, %151 : vector<8x128xf32>
    %153 = vector.extract_strided_slice %146 {offsets = [0, 128], sizes = [8, 128], strides = [1, 1]} : vector<8x512xf32> to vector<8x128xf32>
    %154 = arith.negf %153 : vector<8x128xf32>
    %155 = math.exp %154 : vector<8x128xf32>
    %cst_42 = arith.constant 1.000000e+00 : f32
    %156 = vector.broadcast %cst_42 : f32 to vector<8x128xf32>
    %157 = arith.addf %156, %155 : vector<8x128xf32>
    %158 = arith.divf %156, %157 : vector<8x128xf32>
    %159 = vector.extract_strided_slice %146 {offsets = [0, 256], sizes = [8, 128], strides = [1, 1]} : vector<8x512xf32> to vector<8x128xf32>
    %160 = math.tanh %159 : vector<8x128xf32>
    %161 = vector.extract_strided_slice %146 {offsets = [0, 384], sizes = [8, 128], strides = [1, 1]} : vector<8x512xf32> to vector<8x128xf32>
    %162 = arith.negf %161 : vector<8x128xf32>
    %163 = math.exp %162 : vector<8x128xf32>
    %cst_43 = arith.constant 1.000000e+00 : f32
    %164 = vector.broadcast %cst_43 : f32 to vector<8x128xf32>
    %165 = arith.addf %164, %163 : vector<8x128xf32>
    %166 = arith.divf %164, %165 : vector<8x128xf32>
    %167 = arith.mulf %158, %135 : vector<8x128xf32>
    %168 = arith.mulf %152, %160 : vector<8x128xf32>
    %169 = arith.addf %167, %168 : vector<8x128xf32>
    %170 = math.tanh %169 : vector<8x128xf32>
    %171 = arith.mulf %166, %170 : vector<8x128xf32>
    %172 = arith.index_cast %c4_i32 : i32 to index
    %c0_44 = arith.constant 0 : index
    %c0_45 = arith.constant 0 : index
    %173 = vector.load %arg6[%172, %c0_44, %c0_45] : memref<8x8x128xf32, #tpu.memory_space<vmem>>, vector<1x8x128xf32>
    %174 = vector.shape_cast %173 : vector<1x8x128xf32> to vector<8x128xf32>
    %175 = vector.shape_cast %171 : vector<8x128xf32> to vector<1x8x128xf32>
    tpu.vector_store %arg6[%172, %c0_44, %c0_45], %175 {strides = array<i32>} : memref<8x8x128xf32, #tpu.memory_space<vmem>>, vector<1x8x128xf32>,
    %c5_i32 = arith.constant 5 : i32
    %176 = arith.index_cast %c5_i32 : i32 to index
    %c0_46 = arith.constant 0 : index
    %c0_47 = arith.constant 0 : index
    %177 = vector.load %arg2[%176, %c0_46, %c0_47] : memref<8x8x512xf32, #tpu.memory_space<vmem>>, vector<1x8x512xf32>
    %178 = vector.shape_cast %177 : vector<1x8x512xf32> to vector<8x512xf32>
    %cst_48 = arith.constant dense<0.000000e+00> : vector<8x512xf32>
    %179 = tpu.matmul %171, %3, %cst_48 {dimension_numbers = #tpu.dot_dimension_numbers<[1], [0], [0], [1], [0, 0, 1, 1], [], []>} : vector<8x128xf32>, vector<128x512xf32>, vector<8x512xf32> -> vector<8x512xf32>
    %180 = arith.addf %178, %179 : vector<8x512xf32>
    %181 = vector.extract_strided_slice %180 {offsets = [0, 0], sizes = [8, 128], strides = [1, 1]} : vector<8x512xf32> to vector<8x128xf32>
    %182 = arith.negf %181 : vector<8x128xf32>
    %183 = math.exp %182 : vector<8x128xf32>
    %cst_49 = arith.constant 1.000000e+00 : f32
    %184 = vector.broadcast %cst_49 : f32 to vector<8x128xf32>
    %185 = arith.addf %184, %183 : vector<8x128xf32>
    %186 = arith.divf %184, %185 : vector<8x128xf32>
    %187 = vector.extract_strided_slice %180 {offsets = [0, 128], sizes = [8, 128], strides = [1, 1]} : vector<8x512xf32> to vector<8x128xf32>
    %188 = arith.negf %187 : vector<8x128xf32>
    %189 = math.exp %188 : vector<8x128xf32>
    %cst_50 = arith.constant 1.000000e+00 : f32
    %190 = vector.broadcast %cst_50 : f32 to vector<8x128xf32>
    %191 = arith.addf %190, %189 : vector<8x128xf32>
    %192 = arith.divf %190, %191 : vector<8x128xf32>
    %193 = vector.extract_strided_slice %180 {offsets = [0, 256], sizes = [8, 128], strides = [1, 1]} : vector<8x512xf32> to vector<8x128xf32>
    %194 = math.tanh %193 : vector<8x128xf32>
    %195 = vector.extract_strided_slice %180 {offsets = [0, 384], sizes = [8, 128], strides = [1, 1]} : vector<8x512xf32> to vector<8x128xf32>
    %196 = arith.negf %195 : vector<8x128xf32>
    %197 = math.exp %196 : vector<8x128xf32>
    %cst_51 = arith.constant 1.000000e+00 : f32
    %198 = vector.broadcast %cst_51 : f32 to vector<8x128xf32>
    %199 = arith.addf %198, %197 : vector<8x128xf32>
    %200 = arith.divf %198, %199 : vector<8x128xf32>
    %201 = arith.mulf %192, %169 : vector<8x128xf32>
    %202 = arith.mulf %186, %194 : vector<8x128xf32>
    %203 = arith.addf %201, %202 : vector<8x128xf32>
    %204 = math.tanh %203 : vector<8x128xf32>
    %205 = arith.mulf %200, %204 : vector<8x128xf32>
    %206 = arith.index_cast %c5_i32 : i32 to index
    %c0_52 = arith.constant 0 : index
    %c0_53 = arith.constant 0 : index
    %207 = vector.load %arg6[%206, %c0_52, %c0_53] : memref<8x8x128xf32, #tpu.memory_space<vmem>>, vector<1x8x128xf32>
    %208 = vector.shape_cast %207 : vector<1x8x128xf32> to vector<8x128xf32>
    %209 = vector.shape_cast %205 : vector<8x128xf32> to vector<1x8x128xf32>
    tpu.vector_store %arg6[%206, %c0_52, %c0_53], %209 {strides = array<i32>} : memref<8x8x128xf32, #tpu.memory_space<vmem>>, vector<1x8x128xf32>,
    %c6_i32 = arith.constant 6 : i32
    %210 = arith.index_cast %c6_i32 : i32 to index
    %c0_54 = arith.constant 0 : index
    %c0_55 = arith.constant 0 : index
    %211 = vector.load %arg2[%210, %c0_54, %c0_55] : memref<8x8x512xf32, #tpu.memory_space<vmem>>, vector<1x8x512xf32>
    %212 = vector.shape_cast %211 : vector<1x8x512xf32> to vector<8x512xf32>
    %cst_56 = arith.constant dense<0.000000e+00> : vector<8x512xf32>
    %213 = tpu.matmul %205, %3, %cst_56 {dimension_numbers = #tpu.dot_dimension_numbers<[1], [0], [0], [1], [0, 0, 1, 1], [], []>} : vector<8x128xf32>, vector<128x512xf32>, vector<8x512xf32> -> vector<8x512xf32>
    %214 = arith.addf %212, %213 : vector<8x512xf32>
    %215 = vector.extract_strided_slice %214 {offsets = [0, 0], sizes = [8, 128], strides = [1, 1]} : vector<8x512xf32> to vector<8x128xf32>
    %216 = arith.negf %215 : vector<8x128xf32>
    %217 = math.exp %216 : vector<8x128xf32>
    %cst_57 = arith.constant 1.000000e+00 : f32
    %218 = vector.broadcast %cst_57 : f32 to vector<8x128xf32>
    %219 = arith.addf %218, %217 : vector<8x128xf32>
    %220 = arith.divf %218, %219 : vector<8x128xf32>
    %221 = vector.extract_strided_slice %214 {offsets = [0, 128], sizes = [8, 128], strides = [1, 1]} : vector<8x512xf32> to vector<8x128xf32>
    %222 = arith.negf %221 : vector<8x128xf32>
    %223 = math.exp %222 : vector<8x128xf32>
    %cst_58 = arith.constant 1.000000e+00 : f32
    %224 = vector.broadcast %cst_58 : f32 to vector<8x128xf32>
    %225 = arith.addf %224, %223 : vector<8x128xf32>
    %226 = arith.divf %224, %225 : vector<8x128xf32>
    %227 = vector.extract_strided_slice %214 {offsets = [0, 256], sizes = [8, 128], strides = [1, 1]} : vector<8x512xf32> to vector<8x128xf32>
    %228 = math.tanh %227 : vector<8x128xf32>
    %229 = vector.extract_strided_slice %214 {offsets = [0, 384], sizes = [8, 128], strides = [1, 1]} : vector<8x512xf32> to vector<8x128xf32>
    %230 = arith.negf %229 : vector<8x128xf32>
    %231 = math.exp %230 : vector<8x128xf32>
    %cst_59 = arith.constant 1.000000e+00 : f32
    %232 = vector.broadcast %cst_59 : f32 to vector<8x128xf32>
    %233 = arith.addf %232, %231 : vector<8x128xf32>
    %234 = arith.divf %232, %233 : vector<8x128xf32>
    %235 = arith.mulf %226, %203 : vector<8x128xf32>
    %236 = arith.mulf %220, %228 : vector<8x128xf32>
    %237 = arith.addf %235, %236 : vector<8x128xf32>
    %238 = math.tanh %237 : vector<8x128xf32>
    %239 = arith.mulf %234, %238 : vector<8x128xf32>
    %240 = arith.index_cast %c6_i32 : i32 to index
    %c0_60 = arith.constant 0 : index
    %c0_61 = arith.constant 0 : index
    %241 = vector.load %arg6[%240, %c0_60, %c0_61] : memref<8x8x128xf32, #tpu.memory_space<vmem>>, vector<1x8x128xf32>
    %242 = vector.shape_cast %241 : vector<1x8x128xf32> to vector<8x128xf32>
    %243 = vector.shape_cast %239 : vector<8x128xf32> to vector<1x8x128xf32>
    tpu.vector_store %arg6[%240, %c0_60, %c0_61], %243 {strides = array<i32>} : memref<8x8x128xf32, #tpu.memory_space<vmem>>, vector<1x8x128xf32>,
    %c7_i32 = arith.constant 7 : i32
    %244 = arith.index_cast %c7_i32 : i32 to index
    %c0_62 = arith.constant 0 : index
    %c0_63 = arith.constant 0 : index
    %245 = vector.load %arg2[%244, %c0_62, %c0_63] : memref<8x8x512xf32, #tpu.memory_space<vmem>>, vector<1x8x512xf32>
    %246 = vector.shape_cast %245 : vector<1x8x512xf32> to vector<8x512xf32>
    %cst_64 = arith.constant dense<0.000000e+00> : vector<8x512xf32>
    %247 = tpu.matmul %239, %3, %cst_64 {dimension_numbers = #tpu.dot_dimension_numbers<[1], [0], [0], [1], [0, 0, 1, 1], [], []>} : vector<8x128xf32>, vector<128x512xf32>, vector<8x512xf32> -> vector<8x512xf32>
    %248 = arith.addf %246, %247 : vector<8x512xf32>
    %249 = vector.extract_strided_slice %248 {offsets = [0, 0], sizes = [8, 128], strides = [1, 1]} : vector<8x512xf32> to vector<8x128xf32>
    %250 = arith.negf %249 : vector<8x128xf32>
    %251 = math.exp %250 : vector<8x128xf32>
    %cst_65 = arith.constant 1.000000e+00 : f32
    %252 = vector.broadcast %cst_65 : f32 to vector<8x128xf32>
    %253 = arith.addf %252, %251 : vector<8x128xf32>
    %254 = arith.divf %252, %253 : vector<8x128xf32>
    %255 = vector.extract_strided_slice %248 {offsets = [0, 128], sizes = [8, 128], strides = [1, 1]} : vector<8x512xf32> to vector<8x128xf32>
    %256 = arith.negf %255 : vector<8x128xf32>
    %257 = math.exp %256 : vector<8x128xf32>
    %cst_66 = arith.constant 1.000000e+00 : f32
    %258 = vector.broadcast %cst_66 : f32 to vector<8x128xf32>
    %259 = arith.addf %258, %257 : vector<8x128xf32>
    %260 = arith.divf %258, %259 : vector<8x128xf32>
    %261 = vector.extract_strided_slice %248 {offsets = [0, 256], sizes = [8, 128], strides = [1, 1]} : vector<8x512xf32> to vector<8x128xf32>
    %262 = math.tanh %261 : vector<8x128xf32>
    %263 = vector.extract_strided_slice %248 {offsets = [0, 384], sizes = [8, 128], strides = [1, 1]} : vector<8x512xf32> to vector<8x128xf32>
    %264 = arith.negf %263 : vector<8x128xf32>
    %265 = math.exp %264 : vector<8x128xf32>
    %cst_67 = arith.constant 1.000000e+00 : f32
    %266 = vector.broadcast %cst_67 : f32 to vector<8x128xf32>
    %267 = arith.addf %266, %265 : vector<8x128xf32>
    %268 = arith.divf %266, %267 : vector<8x128xf32>
    %269 = arith.mulf %260, %237 : vector<8x128xf32>
    %270 = arith.mulf %254, %262 : vector<8x128xf32>
    %271 = arith.addf %269, %270 : vector<8x128xf32>
    %272 = math.tanh %271 : vector<8x128xf32>
    %273 = arith.mulf %268, %272 : vector<8x128xf32>
    %274 = arith.index_cast %c7_i32 : i32 to index
    %c0_68 = arith.constant 0 : index
    %c0_69 = arith.constant 0 : index
    %275 = vector.load %arg6[%274, %c0_68, %c0_69] : memref<8x8x128xf32, #tpu.memory_space<vmem>>, vector<1x8x128xf32>
    %276 = vector.shape_cast %275 : vector<1x8x128xf32> to vector<8x128xf32>
    %277 = vector.shape_cast %273 : vector<8x128xf32> to vector<1x8x128xf32>
    tpu.vector_store %arg6[%274, %c0_68, %c0_69], %277 {strides = array<i32>} : memref<8x8x128xf32, #tpu.memory_space<vmem>>, vector<1x8x128xf32>,
    %c8_i32 = arith.constant 8 : i32
    %c0_70 = arith.constant 0 : index
    %c0_71 = arith.constant 0 : index
    %278 = vector.load %arg9[%c0_70, %c0_71] : memref<8x128xf32, #tpu.memory_space<vmem>>, vector<8x128xf32>
    tpu.vector_store %arg9[%c0_70, %c0_71], %273 {strides = array<i32>} : memref<8x128xf32, #tpu.memory_space<vmem>>, vector<8x128xf32>,
    %c0_72 = arith.constant 0 : index
    %c0_73 = arith.constant 0 : index
    %279 = vector.load %arg10[%c0_72, %c0_73] : memref<8x128xf32, #tpu.memory_space<vmem>>, vector<8x128xf32>
    tpu.vector_store %arg10[%c0_72, %c0_73], %271 {strides = array<i32>} : memref<8x128xf32, #tpu.memory_space<vmem>>, vector<8x128xf32>,
    %c0_i32_74 = arith.constant 0 : i32
    %280 = arith.cmpi eq, %arg1, %c0_i32_74 : i32
    %281 = arith.extui %280 : i1 to i32
    %c0_i32_75 = arith.constant 0 : i32
    %282 = arith.cmpi ne, %281, %c0_i32_75 : i32
    scf.if %282 {
      %c0_76 = arith.constant 0 : index
      %c0_77 = arith.constant 0 : index
      %c0_78 = arith.constant 0 : index
      %283 = vector.load %arg7[%c0_76, %c0_77, %c0_78] : memref<1x8x128xf32, #tpu.memory_space<vmem>>, vector<1x8x128xf32>
      %284 = vector.shape_cast %283 : vector<1x8x128xf32> to vector<8x128xf32>
      %285 = vector.shape_cast %273 : vector<8x128xf32> to vector<1x8x128xf32>
      tpu.vector_store %arg7[%c0_76, %c0_77, %c0_78], %285 {strides = array<i32>} : memref<1x8x128xf32, #tpu.memory_space<vmem>>, vector<1x8x128xf32>,
      %c0_79 = arith.constant 0 : index
      %c0_80 = arith.constant 0 : index
      %c0_81 = arith.constant 0 : index
      %286 = vector.load %arg8[%c0_79, %c0_80, %c0_81] : memref<1x8x128xf32, #tpu.memory_space<vmem>>, vector<1x8x128xf32>
      %287 = vector.shape_cast %286 : vector<1x8x128xf32> to vector<8x128xf32>
      %288 = vector.shape_cast %271 : vector<8x128xf32> to vector<1x8x128xf32>
      tpu.vector_store %arg8[%c0_79, %c0_80, %c0_81], %288 {strides = array<i32>} : memref<1x8x128xf32, #tpu.memory_space<vmem>>, vector<1x8x128xf32>,
    } else {
    }
    return
  }
  func.func @transform_0(%arg0: i32, %arg1: i32) -> (i32, i32, i32) {
    %c0_i32 = arith.constant 0 : i32
    %c0_i32_0 = arith.constant 0 : i32
    return %arg1, %arg0, %c0_i32 : i32, i32, i32
  }
  func.func @transform_1(%arg0: i32, %arg1: i32) -> (i32, i32) {
    %c0_i32 = arith.constant 0 : i32
    %c0_i32_0 = arith.constant 0 : i32
    %c0_i32_1 = arith.constant 0 : i32
    return %c0_i32, %c0_i32_0 : i32, i32
  }
  func.func @transform_2(%arg0: i32, %arg1: i32) -> (i32, i32, i32) {
    %c0_i32 = arith.constant 0 : i32
    %c0_i32_0 = arith.constant 0 : i32
    %c0_i32_1 = arith.constant 0 : i32
    return %c0_i32, %arg0, %c0_i32_0 : i32, i32, i32
  }
  func.func @transform_3(%arg0: i32, %arg1: i32) -> (i32, i32, i32) {
    %c0_i32 = arith.constant 0 : i32
    %c0_i32_0 = arith.constant 0 : i32
    %c0_i32_1 = arith.constant 0 : i32
    return %c0_i32, %arg0, %c0_i32_0 : i32, i32, i32
  }
  func.func @transform_4(%arg0: i32, %arg1: i32) -> (i32, i32, i32) {
    %c0_i32 = arith.constant 0 : i32
    %c0_i32_0 = arith.constant 0 : i32
    return %arg1, %arg0, %c0_i32 : i32, i32, i32
  }
  func.func @transform_5(%arg0: i32, %arg1: i32) -> (i32, i32, i32) {
    %c0_i32 = arith.constant 0 : i32
    %c0_i32_0 = arith.constant 0 : i32
    %c0_i32_1 = arith.constant 0 : i32
    return %c0_i32, %arg0, %c0_i32_0 : i32, i32, i32
  }
  func.func @transform_6(%arg0: i32, %arg1: i32) -> (i32, i32, i32) {
    %c0_i32 = arith.constant 0 : i32
    %c0_i32_0 = arith.constant 0 : i32
    %c0_i32_1 = arith.constant 0 : i32
    return %c0_i32, %arg0, %c0_i32_0 : i32, i32, i32
  }
}

</mosaic_0001>

<llo_original>
// kernel: tpu_custom_call.1
$region0: #{tpu_custom_call.1}
  #allocation0 [shape = 'u32[]', space=smem, size = 0x4, offset = 0x4, fixed_abs, tag = 'smem constant byte address 0x4 - core index']
  #allocation1 [shape = 'u32[144,128]{1,0:T(1,128)}', space=vmem, size = 0x12000, scoped, tag = 'internal scratch']
  #allocation2 [shape = 'f32[8,128]{1,0:T(8,128)}', space=vmem, size = 0x1000, scoped, tag = 'scratch operand']
  #allocation3 [shape = 'f32[8,128]{1,0:T(8,128)}', space=vmem, size = 0x1000, scoped, tag = 'scratch operand']
  %s0 = inlined_call_operand.hbm [shape: f32[8,8,512], index: 0, kind: input, shape index: {}]
  %s1 = inlined_call_operand.hbm [shape: f32[128,512], index: 1, kind: input, shape index: {}]
  %s2 = inlined_call_operand.hbm [shape: f32[1,8,128], index: 2, kind: input, shape index: {}]
  %s3 = inlined_call_operand.vmem [shape: f32[1,8,128], index: 3, kind: input, shape index: {}]
  %s4 = inlined_call_operand.hbm [shape: f32[8,8,128], index: 4, kind: output, shape index: {0}]
  %s5 = inlined_call_operand.hbm [shape: f32[1,8,128], index: 5, kind: output, shape index: {1}]
  %s6 = inlined_call_operand.hbm [shape: f32[1,8,128], index: 6, kind: output, shape index: {2}]
  %7 = xla_tuple %s4, %s5, %s6
  %s8 = sld [smem:[#allocation0]]
  $region62: #{tpu_custom_call.1} parent=0
    _
  %s10 = ssub.s32 1, %s8
  %s11 = scalar_select 0, %s10, %s8
  $region1: #{tpu_custom_call.1} parent=0
    #allocation4 [shape = 'u8[131072]{0}', space=vmem, size = 0x20000, scoped, tag = 'input window, operand 0, single buffered']
    #allocation5 [shape = 's32[1]{0}', space=sflag, size = 0x4, scoped, tag = 'scoped memory for tpu_custom_call.1']
    #allocation6 [shape = 's32[1]{0}', space=sflag, size = 0x4, scoped, tag = 'scoped memory for tpu_custom_call.1']
    #allocation7 [shape = 'u8[262144]{0}', space=vmem, size = 0x40000, scoped, tag = 'input window, operand 1, single buffered']
    #allocation8 [shape = 's32[1]{0}', space=sflag, size = 0x4, scoped, tag = 'scoped memory for tpu_custom_call.1']
    #allocation9 [shape = 'u8[4096]{0}', space=vmem, size = 0x1000, scoped, tag = 'input window, operand 2, single buffered']
    #allocation10 [shape = 'u8[32768]{0}', space=vmem, size = 0x8000, scoped, tag = 'output window, operand 0, single buffered']
    #allocation11 [shape = 'u8[4096]{0}', space=vmem, size = 0x1000, scoped, tag = 'output window, operand 1, single buffered']
    #allocation12 [shape = 's32[1]{0}', space=sflag, size = 0x4, scoped, tag = 'scoped memory for tpu_custom_call.1']
    #allocation13 [shape = 'u8[4096]{0}', space=vmem, size = 0x1000, scoped, tag = 'output window, operand 2, single buffered']
    %12 = vsyncpa [#allocation5], 0
    %13 = vsyncpa [#allocation8], 0
    %14 = vsyncpa [#allocation6], 0
    %15 = vsyncpa [#allocation12], 0
    // Predicated region
    $region2: #{tpu_custom_call.1} parent=1 // pred_check
      _
    $region3: #{tpu_custom_call.1} parent=1 // pred_check_branch
      %17 = sbr.rel (0) target = $region5
    $region4: #{tpu_custom_call.1} parent=1 // pred_region
      %s19 = ssub.s32 4096, 4096
      %20 = vsyncadd [#allocation5], %s19
      %s21 = sshll.u32 [#allocation4], 4
      %s22 = int_to_ptr.vmem [resolvable:$true] %s21
      %27 = dma.hbm_to_vmem [thread:$0]  %s0, 4096, %s22, [#allocation5], 512, 512, 32
    $region5: #{tpu_custom_call.1} parent=1 // pred_fallthru
      _
    // Predicated region
    $region6: #{tpu_custom_call.1} parent=1 // pred_check
      _
    $region7: #{tpu_custom_call.1} parent=1 // pred_check_branch
      %29 = sbr.rel (0) target = $region9
    $region8: #{tpu_custom_call.1} parent=1 // pred_region
      %s31 = ssub.s32 8192, 8192
      %32 = vsyncadd [#allocation8], %s31
      %s33 = sshll.u32 [#allocation7], 4
      %s34 = int_to_ptr.vmem [resolvable:$true] %s33
      %39 = dma.hbm_to_vmem [thread:$0]  %s1, 8192, %s34, [#allocation8], 512, 512, 32
    $region9: #{tpu_custom_call.1} parent=1 // pred_fallthru
      _
    // Predicated region
    $region10: #{tpu_custom_call.1} parent=1 // pred_check
      _
    $region11: #{tpu_custom_call.1} parent=1 // pred_check_branch
      %41 = sbr.rel (0) target = $region13
    $region12: #{tpu_custom_call.1} parent=1 // pred_region
      %s43 = ssub.s32 128, 128
      %44 = vsyncadd [#allocation8], %s43
      %s46 = sshll.u32 [#allocation9], 4
      %s47 = int_to_ptr.vmem [resolvable:$true] %s46
      %49 = dma.hbm_to_vmem [thread:$0]  %s2, 128, %s47, [#allocation8]
    $region13: #{tpu_custom_call.1} parent=1 // pred_fallthru
      _
    // Predicated region
    $region14: #{tpu_custom_call.1} parent=1 // pred_check
      _
    $region15: #{tpu_custom_call.1} parent=1 // pred_check_branch
      %51 = sbr.rel (0) target = $region17
    $region16: #{tpu_custom_call.1} parent=1 // pred_region
      _
    $region17: #{tpu_custom_call.1} parent=1 // pred_fallthru
      _
    // Predicated region
    $region18: #{tpu_custom_call.1} parent=1 // pred_check
      _
    $region19: #{tpu_custom_call.1} parent=1 // pred_check_branch
      %53 = sbr.rel (0) target = $region21
    $region20: #{tpu_custom_call.1} parent=1 // pred_region
      %54 = dma.done [#allocation5], 4096
    $region21: #{tpu_custom_call.1} parent=1 // pred_fallthru
      _
    // Predicated region
    $region22: #{tpu_custom_call.1} parent=1 // pred_check
      _
    $region23: #{tpu_custom_call.1} parent=1 // pred_check_branch
      %56 = sbr.rel (0) target = $region25
    $region24: #{tpu_custom_call.1} parent=1 // pred_region
      %57 = dma.done [#allocation8], 8192
    $region25: #{tpu_custom_call.1} parent=1 // pred_fallthru
      _
    // Predicated region
    $region26: #{tpu_custom_call.1} parent=1 // pred_check
      _
    $region27: #{tpu_custom_call.1} parent=1 // pred_check_branch
      %59 = sbr.rel (0) target = $region29
    $region28: #{tpu_custom_call.1} parent=1 // pred_region
      %60 = dma.done [#allocation8], 128
    $region29: #{tpu_custom_call.1} parent=1 // pred_fallthru
      _
    %p61 = scmp.eq.s32.totalorder 0, 0
    // Predicated region
    $region30: #{tpu_custom_call.1} parent=1 // pred_check
      %p62 = pneg %p61
    $region31: #{tpu_custom_call.1} parent=1 // pred_check_branch
      %64 = sbr.rel (%p62) target = $region33
    $region32: #{tpu_custom_call.1} parent=1 // pred_region
      %v65 = vld [vmem:[#allocation9] sm:$0xff]
      %66 = vst [vmem:[#allocation2] sm:$0xff] %v65
      %v67 = vld [vmem:[%s3] sm:$0xff]
      %68 = vst [vmem:[#allocation3] sm:$0xff] %v67
    $region33: #{tpu_custom_call.1} parent=1 // pred_fallthru
      _
    %v69 = vld [vmem:[#allocation7] sm:$0xff]
    %v70 = vld [vmem:[#allocation7 + $0x8] sm:$0xff]
    %v71 = vld [vmem:[#allocation7 + $0x10] sm:$0xff]
    %v72 = vld [vmem:[#allocation7 + $0x18] sm:$0xff]
    %v73 = vld [vmem:[#allocation7 + $0x20] sm:$0xff]
    %v74 = vld [vmem:[#allocation7 + $0x28] sm:$0xff]
    %v75 = vld [vmem:[#allocation7 + $0x30] sm:$0xff]
    %v76 = vld [vmem:[#allocation7 + $0x38] sm:$0xff]
    %v77 = vld [vmem:[#allocation7 + $0x40] sm:$0xff]
    %v78 = vld [vmem:[#allocation7 + $0x48] sm:$0xff]
    %v79 = vld [vmem:[#allocation7 + $0x50] sm:$0xff]
    %v80 = vld [vmem:[#allocation7 + $0x58] sm:$0xff]
    %v81 = vld [vmem:[#allocation7 + $0x60] sm:$0xff]
    %v82 = vld [vmem:[#allocation7 + $0x68] sm:$0xff]
    %v83 = vld [vmem:[#allocation7 + $0x70] sm:$0xff]
    %v84 = vld [vmem:[#allocation7 + $0x78] sm:$0xff]
    %v85 = vld [vmem:[#allocation7 + $0x80] sm:$0xff]
    %v86 = vld [vmem:[#allocation7 + $0x88] sm:$0xff]
    %v87 = vld [vmem:[#allocation7 + $0x90] sm:$0xff]
    %v88 = vld [vmem:[#allocation7 + $0x98] sm:$0xff]
    %v89 = vld [vmem:[#allocation7 + $0xa0] sm:$0xff]
    %v90 = vld [vmem:[#allocation7 + $0xa8] sm:$0xff]
    %v91 = vld [vmem:[#allocation7 + $0xb0] sm:$0xff]
    %v92 = vld [vmem:[#allocation7 + $0xb8] sm:$0xff]
    %v93 = vld [vmem:[#allocation7 + $0xc0] sm:$0xff]
    %v94 = vld [vmem:[#allocation7 + $0xc8] sm:$0xff]
    %v95 = vld [vmem:[#allocation7 + $0xd0] sm:$0xff]
    %v96 = vld [vmem:[#allocation7 + $0xd8] sm:$0xff]
    %v97 = vld [vmem:[#allocation7 + $0xe0] sm:$0xff]
    %v98 = vld [vmem:[#allocation7 + $0xe8] sm:$0xff]
    %v99 = vld [vmem:[#allocation7 + $0xf0] sm:$0xff]
    %v100 = vld [vmem:[#allocation7 + $0xf8] sm:$0xff]
    %v101 = vld [vmem:[#allocation7 + $0x100] sm:$0xff]
    %v102 = vld [vmem:[#allocation7 + $0x108] sm:$0xff]
    %v103 = vld [vmem:[#allocation7 + $0x110] sm:$0xff]
    %v104 = vld [vmem:[#allocation7 + $0x118] sm:$0xff]
    %v105 = vld [vmem:[#allocation7 + $0x120] sm:$0xff]
    %v106 = vld [vmem:[#allocation7 + $0x128] sm:$0xff]
    %v107 = vld [vmem:[#allocation7 + $0x130] sm:$0xff]
    %v108 = vld [vmem:[#allocation7 + $0x138] sm:$0xff]
    %v109 = vld [vmem:[#allocation7 + $0x140] sm:$0xff]
    %v110 = vld [vmem:[#allocation7 + $0x148] sm:$0xff]
    %v111 = vld [vmem:[#allocation7 + $0x150] sm:$0xff]
    %v112 = vld [vmem:[#allocation7 + $0x158] sm:$0xff]
    %v113 = vld [vmem:[#allocation7 + $0x160] sm:$0xff]
    %v114 = vld [vmem:[#allocation7 + $0x168] sm:$0xff]
    %v115 = vld [vmem:[#allocation7 + $0x170] sm:$0xff]
    %v116 = vld [vmem:[#allocation7 + $0x178] sm:$0xff]
    %v117 = vld [vmem:[#allocation7 + $0x180] sm:$0xff]
    %v118 = vld [vmem:[#allocation7 + $0x188] sm:$0xff]
    %v119 = vld [vmem:[#allocation7 + $0x190] sm:$0xff]
    %v120 = vld [vmem:[#allocation7 + $0x198] sm:$0xff]
    %v121 = vld [vmem:[#allocation7 + $0x1a0] sm:$0xff]
    %v122 = vld [vmem:[#allocation7 + $0x1a8] sm:$0xff]
    %v123 = vld [vmem:[#allocation7 + $0x1b0] sm:$0xff]
    %v124 = vld [vmem:[#allocation7 + $0x1b8] sm:$0xff]
    %v125 = vld [vmem:[#allocation7 + $0x1c0] sm:$0xff]
    %v126 = vld [vmem:[#allocation7 + $0x1c8] sm:$0xff]
    %v127 = vld [vmem:[#allocation7 + $0x1d0] sm:$0xff]
    %v128 = vld [vmem:[#allocation7 + $0x1d8] sm:$0xff]
    %v129 = vld [vmem:[#allocation7 + $0x1e0] sm:$0xff]
    %v130 = vld [vmem:[#allocation7 + $0x1e8] sm:$0xff]
    %v131 = vld [vmem:[#allocation7 + $0x1f0] sm:$0xff]
    %v132 = vld [vmem:[#allocation7 + $0x1f8] sm:$0xff]
    %v133 = vld [vmem:[#allocation2] sm:$0xff]
    %v134 = vld [vmem:[#allocation3] sm:$0xff]
    %v135 = vld [vmem:[#allocation4] sm:$0xff]
    %v136 = vld [vmem:[#allocation4 + $0x8] sm:$0xff]
    %v137 = vld [vmem:[#allocation4 + $0x10] sm:$0xff]
    %v138 = vld [vmem:[#allocation4 + $0x18] sm:$0xff]
    %139 = vmatprep.subr.mxu0 %v70
    %140 = vmatpush1.msra.mxu0 %v69
    %141 = vmatprep.subr.mxu0 %v74
    %142 = vmatpush1.msra.mxu0 %v73
    %143 = vmatprep.subr.mxu0 %v78
    %144 = vmatpush1.msra.mxu0 %v77
    %145 = vmatprep.subr.mxu0 %v82
    %146 = vmatpush1.msra.mxu0 %v81
    %147 = vmatprep.subr.mxu0 %v86
    %148 = vmatpush1.msra.mxu0 %v85
    %149 = vmatprep.subr.mxu0 %v90
    %150 = vmatpush1.msra.mxu0 %v89
    %151 = vmatprep.subr.mxu0 %v94
    %152 = vmatpush1.msra.mxu0 %v93
    %153 = vmatprep.subr.mxu0 %v98
    %154 = vmatpush1.msra.mxu0 %v97
    %155 = vmatprep.subr.mxu0 %v102
    %156 = vmatpush1.msra.mxu0 %v101
    %157 = vmatprep.subr.mxu0 %v106
    %158 = vmatpush1.msra.mxu0 %v105
    %159 = vmatprep.subr.mxu0 %v110
    %160 = vmatpush1.msra.mxu0 %v109
    %161 = vmatprep.subr.mxu0 %v114
    %162 = vmatpush1.msra.mxu0 %v113
    %163 = vmatprep.subr.mxu0 %v118
    %164 = vmatpush1.msra.mxu0 %v117
    %165 = vmatprep.subr.mxu0 %v122
    %166 = vmatpush1.msra.mxu0 %v121
    %167 = vmatprep.subr.mxu0 %v126
    %168 = vmatpush1.msra.mxu0 %v125
    %169 = vmatprep.subr.mxu0 %v130
    %170 = vmatpush1.msra.mxu0 %v129
    %171 = vmatprep.subr.mxu0 0.0
    %172 = vmatpush1.msra.mxu0 0.0
    %173 = vmatprep.subr.mxu0 0.0
    %174 = vmatpush1.msra.mxu0 0.0
    %175 = vmatprep.subr.mxu0 0.0
    %176 = vmatpush1.msra.mxu0 0.0
    %177 = vmatprep.subr.mxu0 0.0
    %178 = vmatpush1.msra.mxu0 0.0
    %179 = vmatprep.subr.mxu0 0.0
    %180 = vmatpush1.msra.mxu0 0.0
    %181 = vmatprep.subr.mxu0 0.0
    %182 = vmatpush1.msra.mxu0 0.0
    %183 = vmatprep.subr.mxu0 0.0
    %184 = vmatpush1.msra.mxu0 0.0
    %185 = vmatprep.subr.mxu0 0.0
    %186 = vmatpush1.msra.mxu0 0.0
    %187 = vmatprep.subr.mxu0 0.0
    %188 = vmatpush1.msra.mxu0 0.0
    %189 = vmatprep.subr.mxu0 0.0
    %190 = vmatpush1.msra.mxu0 0.0
    %191 = vmatprep.subr.mxu0 0.0
    %192 = vmatpush1.msra.mxu0 0.0
    %193 = vmatprep.subr.mxu0 0.0
    %194 = vmatpush1.msra.mxu0 0.0
    %195 = vmatprep.subr.mxu0 0.0
    %196 = vmatpush1.msra.mxu0 0.0
    %197 = vmatprep.subr.mxu0 0.0
    %198 = vmatpush1.msra.mxu0 0.0
    %199 = vmatprep.subr.mxu0 0.0
    %200 = vmatpush1.msra.mxu0 0.0
    %201 = vmatprep.subr.mxu0 0.0
    %202 = vmatpush1.msra.mxu0 0.0
    %203 = vmatprep.mubr.f32.mxu0 0.0
    %204 = vmatmul.mubr.f32.gmra.mrb[0].mxu0 %v133
    %v205 = vpop.f32.mrb[0].mxu0
    %v206 = vadd.f32 0.0, %v205
    %v207 = vpop.f32.mrb[0].mxu0
    %v208 = vadd.f32 0.0, %v207
    %209 = vdwg.mxu0
    %210 = vmatprep.subr.mxu0 %v72
    %211 = vmatpush1.msra.mxu0 %v71
    %212 = vmatprep.subr.mxu0 %v76
    %213 = vmatpush1.msra.mxu0 %v75
    %214 = vmatprep.subr.mxu0 %v80
    %215 = vmatpush1.msra.mxu0 %v79
    %216 = vmatprep.subr.mxu0 %v84
    %217 = vmatpush1.msra.mxu0 %v83
    %218 = vmatprep.subr.mxu0 %v88
    %219 = vmatpush1.msra.mxu0 %v87
    %220 = vmatprep.subr.mxu0 %v92
    %221 = vmatpush1.msra.mxu0 %v91
    %222 = vmatprep.subr.mxu0 %v96
    %223 = vmatpush1.msra.mxu0 %v95
    %224 = vmatprep.subr.mxu0 %v100
    %225 = vmatpush1.msra.mxu0 %v99
    %226 = vmatprep.subr.mxu0 %v104
    %227 = vmatpush1.msra.mxu0 %v103
    %228 = vmatprep.subr.mxu0 %v108
    %229 = vmatpush1.msra.mxu0 %v107
    %230 = vmatprep.subr.mxu0 %v112
    %231 = vmatpush1.msra.mxu0 %v111
    %232 = vmatprep.subr.mxu0 %v116
    %233 = vmatpush1.msra.mxu0 %v115
    %234 = vmatprep.subr.mxu0 %v120
    %235 = vmatpush1.msra.mxu0 %v119
    %236 = vmatprep.subr.mxu0 %v124
    %237 = vmatpush1.msra.mxu0 %v123
    %238 = vmatprep.subr.mxu0 %v128
    %239 = vmatpush1.msra.mxu0 %v127
    %240 = vmatprep.subr.mxu0 %v132
    %241 = vmatpush1.msra.mxu0 %v131
    %242 = vmatprep.subr.mxu0 0.0
    %243 = vmatpush1.msra.mxu0 0.0
    %244 = vmatprep.subr.mxu0 0.0
    %245 = vmatpush1.msra.mxu0 0.0
    %246 = vmatprep.subr.mxu0 0.0
    %247 = vmatpush1.msra.mxu0 0.0
    %248 = vmatprep.subr.mxu0 0.0
    %249 = vmatpush1.msra.mxu0 0.0
    %250 = vmatprep.subr.mxu0 0.0
    %251 = vmatpush1.msra.mxu0 0.0
    %252 = vmatprep.subr.mxu0 0.0
    %253 = vmatpush1.msra.mxu0 0.0
    %254 = vmatprep.subr.mxu0 0.0
    %255 = vmatpush1.msra.mxu0 0.0
    %256 = vmatprep.subr.mxu0 0.0
    %257 = vmatpush1.msra.mxu0 0.0
    %258 = vmatprep.subr.mxu0 0.0
    %259 = vmatpush1.msra.mxu0 0.0
    %260 = vmatprep.subr.mxu0 0.0
    %261 = vmatpush1.msra.mxu0 0.0
    %262 = vmatprep.subr.mxu0 0.0
    %263 = vmatpush1.msra.mxu0 0.0
    %264 = vmatprep.subr.mxu0 0.0
    %265 = vmatpush1.msra.mxu0 0.0
    %266 = vmatprep.subr.mxu0 0.0
    %267 = vmatpush1.msra.mxu0 0.0
    %268 = vmatprep.subr.mxu0 0.0
    %269 = vmatpush1.msra.mxu0 0.0
    %270 = vmatprep.subr.mxu0 0.0
    %271 = vmatpush1.msra.mxu0 0.0
    %272 = vmatprep.subr.mxu0 0.0
    %273 = vmatpush1.msra.mxu0 0.0
    %274 = vmatprep.mubr.f32.mxu0 0.0
    %275 = vmatmul.mubr.f32.gmra.mrb[0].mxu0 %v133
    %v276 = vpop.f32.mrb[0].mxu0
    %v277 = vadd.f32 0.0, %v276
    %v278 = vpop.f32.mrb[0].mxu0
    %v279 = vadd.f32 0.0, %v278
    %280 = vdwg.mxu0
    %v281 = vadd.f32 %v135, %v206
    %v282 = vadd.f32 %v136, %v208
    %v283 = vadd.f32 %v137, %v277
    %v284 = vadd.f32 %v138, %v279
    %v285 = vxor.u32 %v281, 2147483648
    %v286 = vmul.f32 %v285, 1.442695
    %v287 = vpow.pop %v286
    %v288 = vadd.f32 %v287, 1.0
    %v289 = vrcp.pop %v288
    %v290 = vmul.f32 1.0, %v289
    %v291 = vxor.u32 %v282, 2147483648
    %v292 = vmul.f32 %v291, 1.442695
    %v293 = vpow.pop %v292
    %v294 = vadd.f32 %v293, 1.0
    %v295 = vrcp.pop %v294
    %v296 = vmul.f32 1.0, %v295
    %v297 = vtanh.pop %v283
    %v298 = vxor.u32 %v284, 2147483648
    %v299 = vmul.f32 %v298, 1.442695
    %v300 = vpow.pop %v299
    %v301 = vadd.f32 %v300, 1.0
    %v302 = vrcp.pop %v301
    %v303 = vmul.f32 1.0, %v302
    %v304 = vmul.f32 %v296, %v134
    %v305 = vmul.f32 %v290, %v297
    %v306 = vadd.f32 %v304, %v305
    %v307 = vtanh.pop %v306
    %v308 = vmul.f32 %v303, %v307
    %309 = vst [vmem:[#allocation10] sm:$0xff] %v308
    %s310 = scalar_lea.vmem [#allocation4], 32
    %v311 = vld [vmem:[%s310] sm:$0xff]
    %v312 = vld [vmem:[%s310 + $0x8] sm:$0xff]
    %v313 = vld [vmem:[%s310 + $0x10] sm:$0xff]
    %v314 = vld [vmem:[%s310 + $0x18] sm:$0xff]
    %315 = vmatprep.subr.mxu0 %v70
    %316 = vmatpush1.msra.mxu0 %v69
    %317 = vmatprep.subr.mxu0 %v74
    %318 = vmatpush1.msra.mxu0 %v73
    %319 = vmatprep.subr.mxu0 %v78
    %320 = vmatpush1.msra.mxu0 %v77
    %321 = vmatprep.subr.mxu0 %v82
    %322 = vmatpush1.msra.mxu0 %v81
    %323 = vmatprep.subr.mxu0 %v86
    %324 = vmatpush1.msra.mxu0 %v85
    %325 = vmatprep.subr.mxu0 %v90
    %326 = vmatpush1.msra.mxu0 %v89
    %327 = vmatprep.subr.mxu0 %v94
    %328 = vmatpush1.msra.mxu0 %v93
    %329 = vmatprep.subr.mxu0 %v98
    %330 = vmatpush1.msra.mxu0 %v97
    %331 = vmatprep.subr.mxu0 %v102
    %332 = vmatpush1.msra.mxu0 %v101
    %333 = vmatprep.subr.mxu0 %v106
    %334 = vmatpush1.msra.mxu0 %v105
    %335 = vmatprep.subr.mxu0 %v110
    %336 = vmatpush1.msra.mxu0 %v109
    %337 = vmatprep.subr.mxu0 %v114
    %338 = vmatpush1.msra.mxu0 %v113
    %339 = vmatprep.subr.mxu0 %v118
    %340 = vmatpush1.msra.mxu0 %v117
    %341 = vmatprep.subr.mxu0 %v122
    %342 = vmatpush1.msra.mxu0 %v121
    %343 = vmatprep.subr.mxu0 %v126
    %344 = vmatpush1.msra.mxu0 %v125
    %345 = vmatprep.subr.mxu0 %v130
    %346 = vmatpush1.msra.mxu0 %v129
    %347 = vmatprep.subr.mxu0 0.0
    %348 = vmatpush1.msra.mxu0 0.0
    %349 = vmatprep.subr.mxu0 0.0
    %350 = vmatpush1.msra.mxu0 0.0
    %351 = vmatprep.subr.mxu0 0.0
    %352 = vmatpush1.msra.mxu0 0.0
    %353 = vmatprep.subr.mxu0 0.0
    %354 = vmatpush1.msra.mxu0 0.0
    %355 = vmatprep.subr.mxu0 0.0
    %356 = vmatpush1.msra.mxu0 0.0
    %357 = vmatprep.subr.mxu0 0.0
    %358 = vmatpush1.msra.mxu0 0.0
    %359 = vmatprep.subr.mxu0 0.0
    %360 = vmatpush1.msra.mxu0 0.0
    %361 = vmatprep.subr.mxu0 0.0
    %362 = vmatpush1.msra.mxu0 0.0
    %363 = vmatprep.subr.mxu0 0.0
    %364 = vmatpush1.msra.mxu0 0.0
    %365 = vmatprep.subr.mxu0 0.0
    %366 = vmatpush1.msra.mxu0 0.0
    %367 = vmatprep.subr.mxu0 0.0
    %368 = vmatpush1.msra.mxu0 0.0
    %369 = vmatprep.subr.mxu0 0.0
    %370 = vmatpush1.msra.mxu0 0.0
    %371 = vmatprep.subr.mxu0 0.0
    %372 = vmatpush1.msra.mxu0 0.0
    %373 = vmatprep.subr.mxu0 0.0
    %374 = vmatpush1.msra.mxu0 0.0
    %375 = vmatprep.subr.mxu0 0.0
    %376 = vmatpush1.msra.mxu0 0.0
    %377 = vmatprep.subr.mxu0 0.0
    %378 = vmatpush1.msra.mxu0 0.0
    %379 = vmatprep.mubr.f32.mxu0 0.0
    %380 = vmatmul.mubr.f32.gmra.mrb[0].mxu0 %v308
    %v381 = vpop.f32.mrb[0].mxu0
    %v382 = vadd.f32 0.0, %v381
    %v383 = vpop.f32.mrb[0].mxu0
    %v384 = vadd.f32 0.0, %v383
    %385 = vdwg.mxu0
    %386 = vmatprep.subr.mxu0 %v72
    %387 = vmatpush1.msra.mxu0 %v71
    %388 = vmatprep.subr.mxu0 %v76
    %389 = vmatpush1.msra.mxu0 %v75
    %390 = vmatprep.subr.mxu0 %v80
    %391 = vmatpush1.msra.mxu0 %v79
    %392 = vmatprep.subr.mxu0 %v84
    %393 = vmatpush1.msra.mxu0 %v83
    %394 = vmatprep.subr.mxu0 %v88
    %395 = vmatpush1.msra.mxu0 %v87
    %396 = vmatprep.subr.mxu0 %v92
    %397 = vmatpush1.msra.mxu0 %v91
    %398 = vmatprep.subr.mxu0 %v96
    %399 = vmatpush1.msra.mxu0 %v95
    %400 = vmatprep.subr.mxu0 %v100
    %401 = vmatpush1.msra.mxu0 %v99
    %402 = vmatprep.subr.mxu0 %v104
    %403 = vmatpush1.msra.mxu0 %v103
    %404 = vmatprep.subr.mxu0 %v108
    %405 = vmatpush1.msra.mxu0 %v107
    %406 = vmatprep.subr.mxu0 %v112
    %407 = vmatpush1.msra.mxu0 %v111
    %408 = vmatprep.subr.mxu0 %v116
    %409 = vmatpush1.msra.mxu0 %v115
    %410 = vmatprep.subr.mxu0 %v120
    %411 = vmatpush1.msra.mxu0 %v119
    %412 = vmatprep.subr.mxu0 %v124
    %413 = vmatpush1.msra.mxu0 %v123
    %414 = vmatprep.subr.mxu0 %v128
    %415 = vmatpush1.msra.mxu0 %v127
    %416 = vmatprep.subr.mxu0 %v132
    %417 = vmatpush1.msra.mxu0 %v131
    %418 = vmatprep.subr.mxu0 0.0
    %419 = vmatpush1.msra.mxu0 0.0
    %420 = vmatprep.subr.mxu0 0.0
    %421 = vmatpush1.msra.mxu0 0.0
    %422 = vmatprep.subr.mxu0 0.0
    %423 = vmatpush1.msra.mxu0 0.0
    %424 = vmatprep.subr.mxu0 0.0
    %425 = vmatpush1.msra.mxu0 0.0
    %426 = vmatprep.subr.mxu0 0.0
    %427 = vmatpush1.msra.mxu0 0.0
    %428 = vmatprep.subr.mxu0 0.0
    %429 = vmatpush1.msra.mxu0 0.0
    %430 = vmatprep.subr.mxu0 0.0
    %431 = vmatpush1.msra.mxu0 0.0
    %432 = vmatprep.subr.mxu0 0.0
    %433 = vmatpush1.msra.mxu0 0.0
    %434 = vmatprep.subr.mxu0 0.0
    %435 = vmatpush1.msra.mxu0 0.0
    %436 = vmatprep.subr.mxu0 0.0
    %437 = vmatpush1.msra.mxu0 0.0
    %438 = vmatprep.subr.mxu0 0.0
    %439 = vmatpush1.msra.mxu0 0.0
    %440 = vmatprep.subr.mxu0 0.0
    %441 = vmatpush1.msra.mxu0 0.0
    %442 = vmatprep.subr.mxu0 0.0
    %443 = vmatpush1.msra.mxu0 0.0
    %444 = vmatprep.subr.mxu0 0.0
    %445 = vmatpush1.msra.mxu0 0.0
    %446 = vmatprep.subr.mxu0 0.0
    %447 = vmatpush1.msra.mxu0 0.0
    %448 = vmatprep.subr.mxu0 0.0
    %449 = vmatpush1.msra.mxu0 0.0
    %450 = vmatprep.mubr.f32.mxu0 0.0
    %451 = vmatmul.mubr.f32.gmra.mrb[0].mxu0 %v308
    %v452 = vpop.f32.mrb[0].mxu0
    %v453 = vadd.f32 0.0, %v452
    %v454 = vpop.f32.mrb[0].mxu0
    %v455 = vadd.f32 0.0, %v454
    %456 = vdwg.mxu0
    %v457 = vadd.f32 %v311, %v382
    %v458 = vadd.f32 %v312, %v384
    %v459 = vadd.f32 %v313, %v453
    %v460 = vadd.f32 %v314, %v455
    %v461 = vxor.u32 %v457, 2147483648
    %v462 = vmul.f32 %v461, 1.442695
    %v463 = vpow.pop %v462
    %v464 = vadd.f32 %v463, 1.0
    %v465 = vrcp.pop %v464
    %v466 = vmul.f32 1.0, %v465
    %v467 = vxor.u32 %v458, 2147483648
    %v468 = vmul.f32 %v467, 1.442695
    %v469 = vpow.pop %v468
    %v470 = vadd.f32 %v469, 1.0
    %v471 = vrcp.pop %v470
    %v472 = vmul.f32 1.0, %v471
    %v473 = vtanh.pop %v459
    %v474 = vxor.u32 %v460, 2147483648
    %v475 = vmul.f32 %v474, 1.442695
    %v476 = vpow.pop %v475
    %v477 = vadd.f32 %v476, 1.0
    %v478 = vrcp.pop %v477
    %v479 = vmul.f32 1.0, %v478
    %v480 = vmul.f32 %v472, %v306
    %v481 = vmul.f32 %v466, %v473
    %v482 = vadd.f32 %v480, %v481
    %v483 = vtanh.pop %v482
    %v484 = vmul.f32 %v479, %v483
    %s485 = scalar_lea.vmem [#allocation10], 8
    %486 = vst [vmem:[%s485] sm:$0xff] %v484
    %s487 = scalar_lea.vmem [#allocation4], 64
    %v488 = vld [vmem:[%s487] sm:$0xff]
    %v489 = vld [vmem:[%s487 + $0x8] sm:$0xff]
    %v490 = vld [vmem:[%s487 + $0x10] sm:$0xff]
    %v491 = vld [vmem:[%s487 + $0x18] sm:$0xff]
    %492 = vmatprep.subr.mxu0 %v70
    %493 = vmatpush1.msra.mxu0 %v69
    %494 = vmatprep.subr.mxu0 %v74
    %495 = vmatpush1.msra.mxu0 %v73
    %496 = vmatprep.subr.mxu0 %v78
    %497 = vmatpush1.msra.mxu0 %v77
    %498 = vmatprep.subr.mxu0 %v82
    %499 = vmatpush1.msra.mxu0 %v81
    %500 = vmatprep.subr.mxu0 %v86
    %501 = vmatpush1.msra.mxu0 %v85
    %502 = vmatprep.subr.mxu0 %v90
    %503 = vmatpush1.msra.mxu0 %v89
    %504 = vmatprep.subr.mxu0 %v94
    %505 = vmatpush1.msra.mxu0 %v93
    %506 = vmatprep.subr.mxu0 %v98
    %507 = vmatpush1.msra.mxu0 %v97
    %508 = vmatprep.subr.mxu0 %v102
    %509 = vmatpush1.msra.mxu0 %v101
    %510 = vmatprep.subr.mxu0 %v106
    %511 = vmatpush1.msra.mxu0 %v105
    %512 = vmatprep.subr.mxu0 %v110
    %513 = vmatpush1.msra.mxu0 %v109
    %514 = vmatprep.subr.mxu0 %v114
    %515 = vmatpush1.msra.mxu0 %v113
    %516 = vmatprep.subr.mxu0 %v118
    %517 = vmatpush1.msra.mxu0 %v117
    %518 = vmatprep.subr.mxu0 %v122
    %519 = vmatpush1.msra.mxu0 %v121
    %520 = vmatprep.subr.mxu0 %v126
    %521 = vmatpush1.msra.mxu0 %v125
    %522 = vmatprep.subr.mxu0 %v130
    %523 = vmatpush1.msra.mxu0 %v129
    %524 = vmatprep.subr.mxu0 0.0
    %525 = vmatpush1.msra.mxu0 0.0
    %526 = vmatprep.subr.mxu0 0.0
    %527 = vmatpush1.msra.mxu0 0.0
    %528 = vmatprep.subr.mxu0 0.0
    %529 = vmatpush1.msra.mxu0 0.0
    %530 = vmatprep.subr.mxu0 0.0
    %531 = vmatpush1.msra.mxu0 0.0
    %532 = vmatprep.subr.mxu0 0.0
    %533 = vmatpush1.msra.mxu0 0.0
    %534 = vmatprep.subr.mxu0 0.0
    %535 = vmatpush1.msra.mxu0 0.0
    %536 = vmatprep.subr.mxu0 0.0
    %537 = vmatpush1.msra.mxu0 0.0
    %538 = vmatprep.subr.mxu0 0.0
    %539 = vmatpush1.msra.mxu0 0.0
    %540 = vmatprep.subr.mxu0 0.0
    %541 = vmatpush1.msra.mxu0 0.0
    %542 = vmatprep.subr.mxu0 0.0
    %543 = vmatpush1.msra.mxu0 0.0
    %544 = vmatprep.subr.mxu0 0.0
    %545 = vmatpush1.msra.mxu0 0.0
    %546 = vmatprep.subr.mxu0 0.0
    %547 = vmatpush1.msra.mxu0 0.0
    %548 = vmatprep.subr.mxu0 0.0
    %549 = vmatpush1.msra.mxu0 0.0
    %550 = vmatprep.subr.mxu0 0.0
    %551 = vmatpush1.msra.mxu0 0.0
    %552 = vmatprep.subr.mxu0 0.0
    %553 = vmatpush1.msra.mxu0 0.0
    %554 = vmatprep.subr.mxu0 0.0
    %555 = vmatpush1.msra.mxu0 0.0
    %556 = vmatprep.mubr.f32.mxu0 0.0
    %557 = vmatmul.mubr.f32.gmra.mrb[0].mxu0 %v484
    %v558 = vpop.f32.mrb[0].mxu0
    %v559 = vadd.f32 0.0, %v558
    %v560 = vpop.f32.mrb[0].mxu0
    %v561 = vadd.f32 0.0, %v560
    %562 = vdwg.mxu0
    %563 = vmatprep.subr.mxu0 %v72
    %564 = vmatpush1.msra.mxu0 %v71
    %565 = vmatprep.subr.mxu0 %v76
    %566 = vmatpush1.msra.mxu0 %v75
    %567 = vmatprep.subr.mxu0 %v80
    %568 = vmatpush1.msra.mxu0 %v79
    %569 = vmatprep.subr.mxu0 %v84
    %570 = vmatpush1.msra.mxu0 %v83
    %571 = vmatprep.subr.mxu0 %v88
    %572 = vmatpush1.msra.mxu0 %v87
    %573 = vmatprep.subr.mxu0 %v92
    %574 = vmatpush1.msra.mxu0 %v91
    %575 = vmatprep.subr.mxu0 %v96
    %576 = vmatpush1.msra.mxu0 %v95
    %577 = vmatprep.subr.mxu0 %v100
    %578 = vmatpush1.msra.mxu0 %v99
    %579 = vmatprep.subr.mxu0 %v104
    %580 = vmatpush1.msra.mxu0 %v103
    %581 = vmatprep.subr.mxu0 %v108
    %582 = vmatpush1.msra.mxu0 %v107
    %583 = vmatprep.subr.mxu0 %v112
    %584 = vmatpush1.msra.mxu0 %v111
    %585 = vmatprep.subr.mxu0 %v116
    %586 = vmatpush1.msra.mxu0 %v115
    %587 = vmatprep.subr.mxu0 %v120
    %588 = vmatpush1.msra.mxu0 %v119
    %589 = vmatprep.subr.mxu0 %v124
    %590 = vmatpush1.msra.mxu0 %v123
    %591 = vmatprep.subr.mxu0 %v128
    %592 = vmatpush1.msra.mxu0 %v127
    %593 = vmatprep.subr.mxu0 %v132
    %594 = vmatpush1.msra.mxu0 %v131
    %595 = vmatprep.subr.mxu0 0.0
    %596 = vmatpush1.msra.mxu0 0.0
    %597 = vmatprep.subr.mxu0 0.0
    %598 = vmatpush1.msra.mxu0 0.0
    %599 = vmatprep.subr.mxu0 0.0
    %600 = vmatpush1.msra.mxu0 0.0
    %601 = vmatprep.subr.mxu0 0.0
    %602 = vmatpush1.msra.mxu0 0.0
    %603 = vmatprep.subr.mxu0 0.0
    %604 = vmatpush1.msra.mxu0 0.0
    %605 = vmatprep.subr.mxu0 0.0
    %606 = vmatpush1.msra.mxu0 0.0
    %607 = vmatprep.subr.mxu0 0.0
    %608 = vmatpush1.msra.mxu0 0.0
    %609 = vmatprep.subr.mxu0 0.0
    %610 = vmatpush1.msra.mxu0 0.0
    %611 = vmatprep.subr.mxu0 0.0
    %612 = vmatpush1.msra.mxu0 0.0
    %613 = vmatprep.subr.mxu0 0.0
    %614 = vmatpush1.msra.mxu0 0.0
    %615 = vmatprep.subr.mxu0 0.0
    %616 = vmatpush1.msra.mxu0 0.0
    %617 = vmatprep.subr.mxu0 0.0
    %618 = vmatpush1.msra.mxu0 0.0
    %619 = vmatprep.subr.mxu0 0.0
    %620 = vmatpush1.msra.mxu0 0.0
    %621 = vmatprep.subr.mxu0 0.0
    %622 = vmatpush1.msra.mxu0 0.0
    %623 = vmatprep.subr.mxu0 0.0
    %624 = vmatpush1.msra.mxu0 0.0
    %625 = vmatprep.subr.mxu0 0.0
    %626 = vmatpush1.msra.mxu0 0.0
    %627 = vmatprep.mubr.f32.mxu0 0.0
    %628 = vmatmul.mubr.f32.gmra.mrb[0].mxu0 %v484
    %v629 = vpop.f32.mrb[0].mxu0
    %v630 = vadd.f32 0.0, %v629
    %v631 = vpop.f32.mrb[0].mxu0
    %v632 = vadd.f32 0.0, %v631
    %633 = vdwg.mxu0
    %v634 = vadd.f32 %v488, %v559
    %v635 = vadd.f32 %v489, %v561
    %v636 = vadd.f32 %v490, %v630
    %v637 = vadd.f32 %v491, %v632
    %v638 = vxor.u32 %v634, 2147483648
    %v639 = vmul.f32 %v638, 1.442695
    %v640 = vpow.pop %v639
    %v641 = vadd.f32 %v640, 1.0
    %v642 = vrcp.pop %v641
    %v643 = vmul.f32 1.0, %v642
    %v644 = vxor.u32 %v635, 2147483648
    %v645 = vmul.f32 %v644, 1.442695
    %v646 = vpow.pop %v645
    %v647 = vadd.f32 %v646, 1.0
    %v648 = vrcp.pop %v647
    %v649 = vmul.f32 1.0, %v648
    %v650 = vtanh.pop %v636
    %v651 = vxor.u32 %v637, 2147483648
    %v652 = vmul.f32 %v651, 1.442695
    %v653 = vpow.pop %v652
    %v654 = vadd.f32 %v653, 1.0
    %v655 = vrcp.pop %v654
    %v656 = vmul.f32 1.0, %v655
    %v657 = vmul.f32 %v649, %v482
    %v658 = vmul.f32 %v643, %v650
    %v659 = vadd.f32 %v657, %v658
    %v660 = vtanh.pop %v659
    %v661 = vmul.f32 %v656, %v660
    %s662 = scalar_lea.vmem [#allocation10], 16
    %663 = vst [vmem:[%s662] sm:$0xff] %v661
    %s664 = scalar_lea.vmem [#allocation4], 96
    %v665 = vld [vmem:[%s664] sm:$0xff]
    %v666 = vld [vmem:[%s664 + $0x8] sm:$0xff]
    %v667 = vld [vmem:[%s664 + $0x10] sm:$0xff]
    %v668 = vld [vmem:[%s664 + $0x18] sm:$0xff]
    %669 = vmatprep.subr.mxu0 %v70
    %670 = vmatpush1.msra.mxu0 %v69
    %671 = vmatprep.subr.mxu0 %v74
    %672 = vmatpush1.msra.mxu0 %v73
    %673 = vmatprep.subr.mxu0 %v78
    %674 = vmatpush1.msra.mxu0 %v77
    %675 = vmatprep.subr.mxu0 %v82
    %676 = vmatpush1.msra.mxu0 %v81
    %677 = vmatprep.subr.mxu0 %v86
    %678 = vmatpush1.msra.mxu0 %v85
    %679 = vmatprep.subr.mxu0 %v90
    %680 = vmatpush1.msra.mxu0 %v89
    %681 = vmatprep.subr.mxu0 %v94
    %682 = vmatpush1.msra.mxu0 %v93
    %683 = vmatprep.subr.mxu0 %v98
    %684 = vmatpush1.msra.mxu0 %v97
    %685 = vmatprep.subr.mxu0 %v102
    %686 = vmatpush1.msra.mxu0 %v101
    %687 = vmatprep.subr.mxu0 %v106
    %688 = vmatpush1.msra.mxu0 %v105
    %689 = vmatprep.subr.mxu0 %v110
    %690 = vmatpush1.msra.mxu0 %v109
    %691 = vmatprep.subr.mxu0 %v114
    %692 = vmatpush1.msra.mxu0 %v113
    %693 = vmatprep.subr.mxu0 %v118
    %694 = vmatpush1.msra.mxu0 %v117
    %695 = vmatprep.subr.mxu0 %v122
    %696 = vmatpush1.msra.mxu0 %v121
    %697 = vmatprep.subr.mxu0 %v126
    %698 = vmatpush1.msra.mxu0 %v125
    %699 = vmatprep.subr.mxu0 %v130
    %700 = vmatpush1.msra.mxu0 %v129
    %701 = vmatprep.subr.mxu0 0.0
    %702 = vmatpush1.msra.mxu0 0.0
    %703 = vmatprep.subr.mxu0 0.0
    %704 = vmatpush1.msra.mxu0 0.0
    %705 = vmatprep.subr.mxu0 0.0
    %706 = vmatpush1.msra.mxu0 0.0
    %707 = vmatprep.subr.mxu0 0.0
    %708 = vmatpush1.msra.mxu0 0.0
    %709 = vmatprep.subr.mxu0 0.0
    %710 = vmatpush1.msra.mxu0 0.0
    %711 = vmatprep.subr.mxu0 0.0
    %712 = vmatpush1.msra.mxu0 0.0
    %713 = vmatprep.subr.mxu0 0.0
    %714 = vmatpush1.msra.mxu0 0.0
    %715 = vmatprep.subr.mxu0 0.0
    %716 = vmatpush1.msra.mxu0 0.0
    %717 = vmatprep.subr.mxu0 0.0
    %718 = vmatpush1.msra.mxu0 0.0
    %719 = vmatprep.subr.mxu0 0.0
    %720 = vmatpush1.msra.mxu0 0.0
    %721 = vmatprep.subr.mxu0 0.0
    %722 = vmatpush1.msra.mxu0 0.0
    %723 = vmatprep.subr.mxu0 0.0
    %724 = vmatpush1.msra.mxu0 0.0
    %725 = vmatprep.subr.mxu0 0.0
    %726 = vmatpush1.msra.mxu0 0.0
    %727 = vmatprep.subr.mxu0 0.0
    %728 = vmatpush1.msra.mxu0 0.0
    %729 = vmatprep.subr.mxu0 0.0
    %730 = vmatpush1.msra.mxu0 0.0
    %731 = vmatprep.subr.mxu0 0.0
    %732 = vmatpush1.msra.mxu0 0.0
    %733 = vmatprep.mubr.f32.mxu0 0.0
    %734 = vmatmul.mubr.f32.gmra.mrb[0].mxu0 %v661
    %v735 = vpop.f32.mrb[0].mxu0
    %v736 = vadd.f32 0.0, %v735
    %v737 = vpop.f32.mrb[0].mxu0
    %v738 = vadd.f32 0.0, %v737
    %739 = vdwg.mxu0
    %740 = vmatprep.subr.mxu0 %v72
    %741 = vmatpush1.msra.mxu0 %v71
    %742 = vmatprep.subr.mxu0 %v76
    %743 = vmatpush1.msra.mxu0 %v75
    %744 = vmatprep.subr.mxu0 %v80
    %745 = vmatpush1.msra.mxu0 %v79
    %746 = vmatprep.subr.mxu0 %v84
    %747 = vmatpush1.msra.mxu0 %v83
    %748 = vmatprep.subr.mxu0 %v88
    %749 = vmatpush1.msra.mxu0 %v87
    %750 = vmatprep.subr.mxu0 %v92
    %751 = vmatpush1.msra.mxu0 %v91
    %752 = vmatprep.subr.mxu0 %v96
    %753 = vmatpush1.msra.mxu0 %v95
    %754 = vmatprep.subr.mxu0 %v100
    %755 = vmatpush1.msra.mxu0 %v99
    %756 = vmatprep.subr.mxu0 %v104
    %757 = vmatpush1.msra.mxu0 %v103
    %758 = vmatprep.subr.mxu0 %v108
    %759 = vmatpush1.msra.mxu0 %v107
    %760 = vmatprep.subr.mxu0 %v112
    %761 = vmatpush1.msra.mxu0 %v111
    %762 = vmatprep.subr.mxu0 %v116
    %763 = vmatpush1.msra.mxu0 %v115
    %764 = vmatprep.subr.mxu0 %v120
    %765 = vmatpush1.msra.mxu0 %v119
    %766 = vmatprep.subr.mxu0 %v124
    %767 = vmatpush1.msra.mxu0 %v123
    %768 = vmatprep.subr.mxu0 %v128
    %769 = vmatpush1.msra.mxu0 %v127
    %770 = vmatprep.subr.mxu0 %v132
    %771 = vmatpush1.msra.mxu0 %v131
    %772 = vmatprep.subr.mxu0 0.0
    %773 = vmatpush1.msra.mxu0 0.0
    %774 = vmatprep.subr.mxu0 0.0
    %775 = vmatpush1.msra.mxu0 0.0
    %776 = vmatprep.subr.mxu0 0.0
    %777 = vmatpush1.msra.mxu0 0.0
    %778 = vmatprep.subr.mxu0 0.0
    %779 = vmatpush1.msra.mxu0 0.0
    %780 = vmatprep.subr.mxu0 0.0
    %781 = vmatpush1.msra.mxu0 0.0
    %782 = vmatprep.subr.mxu0 0.0
    %783 = vmatpush1.msra.mxu0 0.0
    %784 = vmatprep.subr.mxu0 0.0
    %785 = vmatpush1.msra.mxu0 0.0
    %786 = vmatprep.subr.mxu0 0.0
    %787 = vmatpush1.msra.mxu0 0.0
    %788 = vmatprep.subr.mxu0 0.0
    %789 = vmatpush1.msra.mxu0 0.0
    %790 = vmatprep.subr.mxu0 0.0
    %791 = vmatpush1.msra.mxu0 0.0
    %792 = vmatprep.subr.mxu0 0.0
    %793 = vmatpush1.msra.mxu0 0.0
    %794 = vmatprep.subr.mxu0 0.0
    %795 = vmatpush1.msra.mxu0 0.0
    %796 = vmatprep.subr.mxu0 0.0
    %797 = vmatpush1.msra.mxu0 0.0
    %798 = vmatprep.subr.mxu0 0.0
    %799 = vmatpush1.msra.mxu0 0.0
    %800 = vmatprep.subr.mxu0 0.0
    %801 = vmatpush1.msra.mxu0 0.0
    %802 = vmatprep.subr.mxu0 0.0
    %803 = vmatpush1.msra.mxu0 0.0
    %804 = vmatprep.mubr.f32.mxu0 0.0
    %805 = vmatmul.mubr.f32.gmra.mrb[0].mxu0 %v661
    %v806 = vpop.f32.mrb[0].mxu0
    %v807 = vadd.f32 0.0, %v806
    %v808 = vpop.f32.mrb[0].mxu0
    %v809 = vadd.f32 0.0, %v808
    %810 = vdwg.mxu0
    %v811 = vadd.f32 %v665, %v736
    %v812 = vadd.f32 %v666, %v738
    %v813 = vadd.f32 %v667, %v807
    %v814 = vadd.f32 %v668, %v809
    %v815 = vxor.u32 %v811, 2147483648
    %v816 = vmul.f32 %v815, 1.442695
    %v817 = vpow.pop %v816
    %v818 = vadd.f32 %v817, 1.0
    %v819 = vrcp.pop %v818
    %v820 = vmul.f32 1.0, %v819
    %v821 = vxor.u32 %v812, 2147483648
    %v822 = vmul.f32 %v821, 1.442695
    %v823 = vpow.pop %v822
    %v824 = vadd.f32 %v823, 1.0
    %v825 = vrcp.pop %v824
    %v826 = vmul.f32 1.0, %v825
    %v827 = vtanh.pop %v813
    %v828 = vxor.u32 %v814, 2147483648
    %v829 = vmul.f32 %v828, 1.442695
    %v830 = vpow.pop %v829
    %v831 = vadd.f32 %v830, 1.0
    %v832 = vrcp.pop %v831
    %v833 = vmul.f32 1.0, %v832
    %v834 = vmul.f32 %v826, %v659
    %v835 = vmul.f32 %v820, %v827
    %v836 = vadd.f32 %v834, %v835
    %v837 = vtanh.pop %v836
    %v838 = vmul.f32 %v833, %v837
    %s839 = scalar_lea.vmem [#allocation10], 24
    %840 = vst [vmem:[%s839] sm:$0xff] %v838
    %s841 = scalar_lea.vmem [#allocation4], 128
    %v842 = vld [vmem:[%s841] sm:$0xff]
    %v843 = vld [vmem:[%s841 + $0x8] sm:$0xff]
    %v844 = vld [vmem:[%s841 + $0x10] sm:$0xff]
    %v845 = vld [vmem:[%s841 + $0x18] sm:$0xff]
    %846 = vmatprep.subr.mxu0 %v70
    %847 = vmatpush1.msra.mxu0 %v69
    %848 = vmatprep.subr.mxu0 %v74
    %849 = vmatpush1.msra.mxu0 %v73
    %850 = vmatprep.subr.mxu0 %v78
    %851 = vmatpush1.msra.mxu0 %v77
    %852 = vmatprep.subr.mxu0 %v82
    %853 = vmatpush1.msra.mxu0 %v81
    %854 = vmatprep.subr.mxu0 %v86
    %855 = vmatpush1.msra.mxu0 %v85
    %856 = vmatprep.subr.mxu0 %v90
    %857 = vmatpush1.msra.mxu0 %v89
    %858 = vmatprep.subr.mxu0 %v94
    %859 = vmatpush1.msra.mxu0 %v93
    %860 = vmatprep.subr.mxu0 %v98
    %861 = vmatpush1.msra.mxu0 %v97
    %862 = vmatprep.subr.mxu0 %v102
    %863 = vmatpush1.msra.mxu0 %v101
    %864 = vmatprep.subr.mxu0 %v106
    %865 = vmatpush1.msra.mxu0 %v105
    %866 = vmatprep.subr.mxu0 %v110
    %867 = vmatpush1.msra.mxu0 %v109
    %868 = vmatprep.subr.mxu0 %v114
    %869 = vmatpush1.msra.mxu0 %v113
    %870 = vmatprep.subr.mxu0 %v118
    %871 = vmatpush1.msra.mxu0 %v117
    %872 = vmatprep.subr.mxu0 %v122
    %873 = vmatpush1.msra.mxu0 %v121
    %874 = vmatprep.subr.mxu0 %v126
    %875 = vmatpush1.msra.mxu0 %v125
    %876 = vmatprep.subr.mxu0 %v130
    %877 = vmatpush1.msra.mxu0 %v129
    %878 = vmatprep.subr.mxu0 0.0
    %879 = vmatpush1.msra.mxu0 0.0
    %880 = vmatprep.subr.mxu0 0.0
    %881 = vmatpush1.msra.mxu0 0.0
    %882 = vmatprep.subr.mxu0 0.0
    %883 = vmatpush1.msra.mxu0 0.0
    %884 = vmatprep.subr.mxu0 0.0
    %885 = vmatpush1.msra.mxu0 0.0
    %886 = vmatprep.subr.mxu0 0.0
    %887 = vmatpush1.msra.mxu0 0.0
    %888 = vmatprep.subr.mxu0 0.0
    %889 = vmatpush1.msra.mxu0 0.0
    %890 = vmatprep.subr.mxu0 0.0
    %891 = vmatpush1.msra.mxu0 0.0
    %892 = vmatprep.subr.mxu0 0.0
    %893 = vmatpush1.msra.mxu0 0.0
    %894 = vmatprep.subr.mxu0 0.0
    %895 = vmatpush1.msra.mxu0 0.0
    %896 = vmatprep.subr.mxu0 0.0
    %897 = vmatpush1.msra.mxu0 0.0
    %898 = vmatprep.subr.mxu0 0.0
    %899 = vmatpush1.msra.mxu0 0.0
    %900 = vmatprep.subr.mxu0 0.0
    %901 = vmatpush1.msra.mxu0 0.0
    %902 = vmatprep.subr.mxu0 0.0
    %903 = vmatpush1.msra.mxu0 0.0
    %904 = vmatprep.subr.mxu0 0.0
    %905 = vmatpush1.msra.mxu0 0.0
    %906 = vmatprep.subr.mxu0 0.0
    %907 = vmatpush1.msra.mxu0 0.0
    %908 = vmatprep.subr.mxu0 0.0
    %909 = vmatpush1.msra.mxu0 0.0
    %910 = vmatprep.mubr.f32.mxu0 0.0
    %911 = vmatmul.mubr.f32.gmra.mrb[0].mxu0 %v838
    %v912 = vpop.f32.mrb[0].mxu0
    %v913 = vadd.f32 0.0, %v912
    %v914 = vpop.f32.mrb[0].mxu0
    %v915 = vadd.f32 0.0, %v914
    %916 = vdwg.mxu0
    %917 = vmatprep.subr.mxu0 %v72
    %918 = vmatpush1.msra.mxu0 %v71
    %919 = vmatprep.subr.mxu0 %v76
    %920 = vmatpush1.msra.mxu0 %v75
    %921 = vmatprep.subr.mxu0 %v80
    %922 = vmatpush1.msra.mxu0 %v79
    %923 = vmatprep.subr.mxu0 %v84
    %924 = vmatpush1.msra.mxu0 %v83
    %925 = vmatprep.subr.mxu0 %v88
    %926 = vmatpush1.msra.mxu0 %v87
    %927 = vmatprep.subr.mxu0 %v92
    %928 = vmatpush1.msra.mxu0 %v91
    %929 = vmatprep.subr.mxu0 %v96
    %930 = vmatpush1.msra.mxu0 %v95
    %931 = vmatprep.subr.mxu0 %v100
    %932 = vmatpush1.msra.mxu0 %v99
    %933 = vmatprep.subr.mxu0 %v104
    %934 = vmatpush1.msra.mxu0 %v103
    %935 = vmatprep.subr.mxu0 %v108
    %936 = vmatpush1.msra.mxu0 %v107
    %937 = vmatprep.subr.mxu0 %v112
    %938 = vmatpush1.msra.mxu0 %v111
    %939 = vmatprep.subr.mxu0 %v116
    %940 = vmatpush1.msra.mxu0 %v115
    %941 = vmatprep.subr.mxu0 %v120
    %942 = vmatpush1.msra.mxu0 %v119
    %943 = vmatprep.subr.mxu0 %v124
    %944 = vmatpush1.msra.mxu0 %v123
    %945 = vmatprep.subr.mxu0 %v128
    %946 = vmatpush1.msra.mxu0 %v127
    %947 = vmatprep.subr.mxu0 %v132
    %948 = vmatpush1.msra.mxu0 %v131
    %949 = vmatprep.subr.mxu0 0.0
    %950 = vmatpush1.msra.mxu0 0.0
    %951 = vmatprep.subr.mxu0 0.0
    %952 = vmatpush1.msra.mxu0 0.0
    %953 = vmatprep.subr.mxu0 0.0
    %954 = vmatpush1.msra.mxu0 0.0
    %955 = vmatprep.subr.mxu0 0.0
    %956 = vmatpush1.msra.mxu0 0.0
    %957 = vmatprep.subr.mxu0 0.0
    %958 = vmatpush1.msra.mxu0 0.0
    %959 = vmatprep.subr.mxu0 0.0
    %960 = vmatpush1.msra.mxu0 0.0
    %961 = vmatprep.subr.mxu0 0.0
    %962 = vmatpush1.msra.mxu0 0.0
    %963 = vmatprep.subr.mxu0 0.0
    %964 = vmatpush1.msra.mxu0 0.0
    %965 = vmatprep.subr.mxu0 0.0
    %966 = vmatpush1.msra.mxu0 0.0
    %967 = vmatprep.subr.mxu0 0.0
    %968 = vmatpush1.msra.mxu0 0.0
    %969 = vmatprep.subr.mxu0 0.0
    %970 = vmatpush1.msra.mxu0 0.0
    %971 = vmatprep.subr.mxu0 0.0
    %972 = vmatpush1.msra.mxu0 0.0
    %973 = vmatprep.subr.mxu0 0.0
    %974 = vmatpush1.msra.mxu0 0.0
    %975 = vmatprep.subr.mxu0 0.0
    %976 = vmatpush1.msra.mxu0 0.0
    %977 = vmatprep.subr.mxu0 0.0
    %978 = vmatpush1.msra.mxu0 0.0
    %979 = vmatprep.subr.mxu0 0.0
    %980 = vmatpush1.msra.mxu0 0.0
    %981 = vmatprep.mubr.f32.mxu0 0.0
    %982 = vmatmul.mubr.f32.gmra.mrb[0].mxu0 %v838
    %v983 = vpop.f32.mrb[0].mxu0
    %v984 = vadd.f32 0.0, %v983
    %v985 = vpop.f32.mrb[0].mxu0
    %v986 = vadd.f32 0.0, %v985
    %987 = vdwg.mxu0
    %v988 = vadd.f32 %v842, %v913
    %v989 = vadd.f32 %v843, %v915
    %v990 = vadd.f32 %v844, %v984
    %v991 = vadd.f32 %v845, %v986
    %v992 = vxor.u32 %v988, 2147483648
    %v993 = vmul.f32 %v992, 1.442695
    %v994 = vpow.pop %v993
    %v995 = vadd.f32 %v994, 1.0
    %v996 = vrcp.pop %v995
    %v997 = vmul.f32 1.0, %v996
    %v998 = vxor.u32 %v989, 2147483648
    %v999 = vmul.f32 %v998, 1.442695
    %v1000 = vpow.pop %v999
    %v1001 = vadd.f32 %v1000, 1.0
    %v1002 = vrcp.pop %v1001
    %v1003 = vmul.f32 1.0, %v1002
    %v1004 = vtanh.pop %v990
    %v1005 = vxor.u32 %v991, 2147483648
    %v1006 = vmul.f32 %v1005, 1.442695
    %v1007 = vpow.pop %v1006
    %v1008 = vadd.f32 %v1007, 1.0
    %v1009 = vrcp.pop %v1008
    %v1010 = vmul.f32 1.0, %v1009
    %v1011 = vmul.f32 %v1003, %v836
    %v1012 = vmul.f32 %v997, %v1004
    %v1013 = vadd.f32 %v1011, %v1012
    %v1014 = vtanh.pop %v1013
    %v1015 = vmul.f32 %v1010, %v1014
    %s1016 = scalar_lea.vmem [#allocation10], 32
    %1017 = vst [vmem:[%s1016] sm:$0xff] %v1015
    %s1018 = scalar_lea.vmem [#allocation4], 160
    %v1019 = vld [vmem:[%s1018] sm:$0xff]
    %v1020 = vld [vmem:[%s1018 + $0x8] sm:$0xff]
    %v1021 = vld [vmem:[%s1018 + $0x10] sm:$0xff]
    %v1022 = vld [vmem:[%s1018 + $0x18] sm:$0xff]
    %1023 = vmatprep.subr.mxu0 %v70
    %1024 = vmatpush1.msra.mxu0 %v69
    %1025 = vmatprep.subr.mxu0 %v74
    %1026 = vmatpush1.msra.mxu0 %v73
    %1027 = vmatprep.subr.mxu0 %v78
    %1028 = vmatpush1.msra.mxu0 %v77
    %1029 = vmatprep.subr.mxu0 %v82
    %1030 = vmatpush1.msra.mxu0 %v81
    %1031 = vmatprep.subr.mxu0 %v86
    %1032 = vmatpush1.msra.mxu0 %v85
    %1033 = vmatprep.subr.mxu0 %v90
    %1034 = vmatpush1.msra.mxu0 %v89
    %1035 = vmatprep.subr.mxu0 %v94
    %1036 = vmatpush1.msra.mxu0 %v93
    %1037 = vmatprep.subr.mxu0 %v98
    %1038 = vmatpush1.msra.mxu0 %v97
    %1039 = vmatprep.subr.mxu0 %v102
    %1040 = vmatpush1.msra.mxu0 %v101
    %1041 = vmatprep.subr.mxu0 %v106
    %1042 = vmatpush1.msra.mxu0 %v105
    %1043 = vmatprep.subr.mxu0 %v110
    %1044 = vmatpush1.msra.mxu0 %v109
    %1045 = vmatprep.subr.mxu0 %v114
    %1046 = vmatpush1.msra.mxu0 %v113
    %1047 = vmatprep.subr.mxu0 %v118
    %1048 = vmatpush1.msra.mxu0 %v117
    %1049 = vmatprep.subr.mxu0 %v122
    %1050 = vmatpush1.msra.mxu0 %v121
    %1051 = vmatprep.subr.mxu0 %v126
    %1052 = vmatpush1.msra.mxu0 %v125
    %1053 = vmatprep.subr.mxu0 %v130
    %1054 = vmatpush1.msra.mxu0 %v129
    %1055 = vmatprep.subr.mxu0 0.0
    %1056 = vmatpush1.msra.mxu0 0.0
    %1057 = vmatprep.subr.mxu0 0.0
    %1058 = vmatpush1.msra.mxu0 0.0
    %1059 = vmatprep.subr.mxu0 0.0
    %1060 = vmatpush1.msra.mxu0 0.0
    %1061 = vmatprep.subr.mxu0 0.0
    %1062 = vmatpush1.msra.mxu0 0.0
    %1063 = vmatprep.subr.mxu0 0.0
    %1064 = vmatpush1.msra.mxu0 0.0
    %1065 = vmatprep.subr.mxu0 0.0
    %1066 = vmatpush1.msra.mxu0 0.0
    %1067 = vmatprep.subr.mxu0 0.0
    %1068 = vmatpush1.msra.mxu0 0.0
    %1069 = vmatprep.subr.mxu0 0.0
    %1070 = vmatpush1.msra.mxu0 0.0
    %1071 = vmatprep.subr.mxu0 0.0
    %1072 = vmatpush1.msra.mxu0 0.0
    %1073 = vmatprep.subr.mxu0 0.0
    %1074 = vmatpush1.msra.mxu0 0.0
    %1075 = vmatprep.subr.mxu0 0.0
    %1076 = vmatpush1.msra.mxu0 0.0
    %1077 = vmatprep.subr.mxu0 0.0
    %1078 = vmatpush1.msra.mxu0 0.0
    %1079 = vmatprep.subr.mxu0 0.0
    %1080 = vmatpush1.msra.mxu0 0.0
    %1081 = vmatprep.subr.mxu0 0.0
    %1082 = vmatpush1.msra.mxu0 0.0
    %1083 = vmatprep.subr.mxu0 0.0
    %1084 = vmatpush1.msra.mxu0 0.0
    %1085 = vmatprep.subr.mxu0 0.0
    %1086 = vmatpush1.msra.mxu0 0.0
    %1087 = vmatprep.mubr.f32.mxu0 0.0
    %1088 = vmatmul.mubr.f32.gmra.mrb[0].mxu0 %v1015
    %v1089 = vpop.f32.mrb[0].mxu0
    %v1090 = vadd.f32 0.0, %v1089
    %v1091 = vpop.f32.mrb[0].mxu0
    %v1092 = vadd.f32 0.0, %v1091
    %1093 = vdwg.mxu0
    %1094 = vmatprep.subr.mxu0 %v72
    %1095 = vmatpush1.msra.mxu0 %v71
    %1096 = vmatprep.subr.mxu0 %v76
    %1097 = vmatpush1.msra.mxu0 %v75
    %1098 = vmatprep.subr.mxu0 %v80
    %1099 = vmatpush1.msra.mxu0 %v79
    %1100 = vmatprep.subr.mxu0 %v84
    %1101 = vmatpush1.msra.mxu0 %v83
    %1102 = vmatprep.subr.mxu0 %v88
    %1103 = vmatpush1.msra.mxu0 %v87
    %1104 = vmatprep.subr.mxu0 %v92
    %1105 = vmatpush1.msra.mxu0 %v91
    %1106 = vmatprep.subr.mxu0 %v96
    %1107 = vmatpush1.msra.mxu0 %v95
    %1108 = vmatprep.subr.mxu0 %v100
    %1109 = vmatpush1.msra.mxu0 %v99
    %1110 = vmatprep.subr.mxu0 %v104
    %1111 = vmatpush1.msra.mxu0 %v103
    %1112 = vmatprep.subr.mxu0 %v108
    %1113 = vmatpush1.msra.mxu0 %v107
    %1114 = vmatprep.subr.mxu0 %v112
    %1115 = vmatpush1.msra.mxu0 %v111
    %1116 = vmatprep.subr.mxu0 %v116
    %1117 = vmatpush1.msra.mxu0 %v115
    %1118 = vmatprep.subr.mxu0 %v120
    %1119 = vmatpush1.msra.mxu0 %v119
    %1120 = vmatprep.subr.mxu0 %v124
    %1121 = vmatpush1.msra.mxu0 %v123
    %1122 = vmatprep.subr.mxu0 %v128
    %1123 = vmatpush1.msra.mxu0 %v127
    %1124 = vmatprep.subr.mxu0 %v132
    %1125 = vmatpush1.msra.mxu0 %v131
    %1126 = vmatprep.subr.mxu0 0.0
    %1127 = vmatpush1.msra.mxu0 0.0
    %1128 = vmatprep.subr.mxu0 0.0
    %1129 = vmatpush1.msra.mxu0 0.0
    %1130 = vmatprep.subr.mxu0 0.0
    %1131 = vmatpush1.msra.mxu0 0.0
    %1132 = vmatprep.subr.mxu0 0.0
    %1133 = vmatpush1.msra.mxu0 0.0
    %1134 = vmatprep.subr.mxu0 0.0
    %1135 = vmatpush1.msra.mxu0 0.0
    %1136 = vmatprep.subr.mxu0 0.0
    %1137 = vmatpush1.msra.mxu0 0.0
    %1138 = vmatprep.subr.mxu0 0.0
    %1139 = vmatpush1.msra.mxu0 0.0
    %1140 = vmatprep.subr.mxu0 0.0
    %1141 = vmatpush1.msra.mxu0 0.0
    %1142 = vmatprep.subr.mxu0 0.0
    %1143 = vmatpush1.msra.mxu0 0.0
    %1144 = vmatprep.subr.mxu0 0.0
    %1145 = vmatpush1.msra.mxu0 0.0
    %1146 = vmatprep.subr.mxu0 0.0
    %1147 = vmatpush1.msra.mxu0 0.0
    %1148 = vmatprep.subr.mxu0 0.0
    %1149 = vmatpush1.msra.mxu0 0.0
    %1150 = vmatprep.subr.mxu0 0.0
    %1151 = vmatpush1.msra.mxu0 0.0
    %1152 = vmatprep.subr.mxu0 0.0
    %1153 = vmatpush1.msra.mxu0 0.0
    %1154 = vmatprep.subr.mxu0 0.0
    %1155 = vmatpush1.msra.mxu0 0.0
    %1156 = vmatprep.subr.mxu0 0.0
    %1157 = vmatpush1.msra.mxu0 0.0
    %1158 = vmatprep.mubr.f32.mxu0 0.0
    %1159 = vmatmul.mubr.f32.gmra.mrb[0].mxu0 %v1015
    %v1160 = vpop.f32.mrb[0].mxu0
    %v1161 = vadd.f32 0.0, %v1160
    %v1162 = vpop.f32.mrb[0].mxu0
    %v1163 = vadd.f32 0.0, %v1162
    %1164 = vdwg.mxu0
    %v1165 = vadd.f32 %v1019, %v1090
    %v1166 = vadd.f32 %v1020, %v1092
    %v1167 = vadd.f32 %v1021, %v1161
    %v1168 = vadd.f32 %v1022, %v1163
    %v1169 = vxor.u32 %v1165, 2147483648
    %v1170 = vmul.f32 %v1169, 1.442695
    %v1171 = vpow.pop %v1170
    %v1172 = vadd.f32 %v1171, 1.0
    %v1173 = vrcp.pop %v1172
    %v1174 = vmul.f32 1.0, %v1173
    %v1175 = vxor.u32 %v1166, 2147483648
    %v1176 = vmul.f32 %v1175, 1.442695
    %v1177 = vpow.pop %v1176
    %v1178 = vadd.f32 %v1177, 1.0
    %v1179 = vrcp.pop %v1178
    %v1180 = vmul.f32 1.0, %v1179
    %v1181 = vtanh.pop %v1167
    %v1182 = vxor.u32 %v1168, 2147483648
    %v1183 = vmul.f32 %v1182, 1.442695
    %v1184 = vpow.pop %v1183
    %v1185 = vadd.f32 %v1184, 1.0
    %v1186 = vrcp.pop %v1185
    %v1187 = vmul.f32 1.0, %v1186
    %v1188 = vmul.f32 %v1180, %v1013
    %v1189 = vmul.f32 %v1174, %v1181
    %v1190 = vadd.f32 %v1188, %v1189
    %v1191 = vtanh.pop %v1190
    %v1192 = vmul.f32 %v1187, %v1191
    %s1193 = scalar_lea.vmem [#allocation10], 40
    %1194 = vst [vmem:[%s1193] sm:$0xff] %v1192
    %s1195 = scalar_lea.vmem [#allocation4], 192
    %v1196 = vld [vmem:[%s1195] sm:$0xff]
    %v1197 = vld [vmem:[%s1195 + $0x8] sm:$0xff]
    %v1198 = vld [vmem:[%s1195 + $0x10] sm:$0xff]
    %v1199 = vld [vmem:[%s1195 + $0x18] sm:$0xff]
    %1200 = vmatprep.subr.mxu0 %v70
    %1201 = vmatpush1.msra.mxu0 %v69
    %1202 = vmatprep.subr.mxu0 %v74
    %1203 = vmatpush1.msra.mxu0 %v73
    %1204 = vmatprep.subr.mxu0 %v78
    %1205 = vmatpush1.msra.mxu0 %v77
    %1206 = vmatprep.subr.mxu0 %v82
    %1207 = vmatpush1.msra.mxu0 %v81
    %1208 = vmatprep.subr.mxu0 %v86
    %1209 = vmatpush1.msra.mxu0 %v85
    %1210 = vmatprep.subr.mxu0 %v90
    %1211 = vmatpush1.msra.mxu0 %v89
    %1212 = vmatprep.subr.mxu0 %v94
    %1213 = vmatpush1.msra.mxu0 %v93
    %1214 = vmatprep.subr.mxu0 %v98
    %1215 = vmatpush1.msra.mxu0 %v97
    %1216 = vmatprep.subr.mxu0 %v102
    %1217 = vmatpush1.msra.mxu0 %v101
    %1218 = vmatprep.subr.mxu0 %v106
    %1219 = vmatpush1.msra.mxu0 %v105
    %1220 = vmatprep.subr.mxu0 %v110
    %1221 = vmatpush1.msra.mxu0 %v109
    %1222 = vmatprep.subr.mxu0 %v114
    %1223 = vmatpush1.msra.mxu0 %v113
    %1224 = vmatprep.subr.mxu0 %v118
    %1225 = vmatpush1.msra.mxu0 %v117
    %1226 = vmatprep.subr.mxu0 %v122
    %1227 = vmatpush1.msra.mxu0 %v121
    %1228 = vmatprep.subr.mxu0 %v126
    %1229 = vmatpush1.msra.mxu0 %v125
    %1230 = vmatprep.subr.mxu0 %v130
    %1231 = vmatpush1.msra.mxu0 %v129
    %1232 = vmatprep.subr.mxu0 0.0
    %1233 = vmatpush1.msra.mxu0 0.0
    %1234 = vmatprep.subr.mxu0 0.0
    %1235 = vmatpush1.msra.mxu0 0.0
    %1236 = vmatprep.subr.mxu0 0.0
    %1237 = vmatpush1.msra.mxu0 0.0
    %1238 = vmatprep.subr.mxu0 0.0
    %1239 = vmatpush1.msra.mxu0 0.0
    %1240 = vmatprep.subr.mxu0 0.0
    %1241 = vmatpush1.msra.mxu0 0.0
    %1242 = vmatprep.subr.mxu0 0.0
    %1243 = vmatpush1.msra.mxu0 0.0
    %1244 = vmatprep.subr.mxu0 0.0
    %1245 = vmatpush1.msra.mxu0 0.0
    %1246 = vmatprep.subr.mxu0 0.0
    %1247 = vmatpush1.msra.mxu0 0.0
    %1248 = vmatprep.subr.mxu0 0.0
    %1249 = vmatpush1.msra.mxu0 0.0
    %1250 = vmatprep.subr.mxu0 0.0
    %1251 = vmatpush1.msra.mxu0 0.0
    %1252 = vmatprep.subr.mxu0 0.0
    %1253 = vmatpush1.msra.mxu0 0.0
    %1254 = vmatprep.subr.mxu0 0.0
    %1255 = vmatpush1.msra.mxu0 0.0
    %1256 = vmatprep.subr.mxu0 0.0
    %1257 = vmatpush1.msra.mxu0 0.0
    %1258 = vmatprep.subr.mxu0 0.0
    %1259 = vmatpush1.msra.mxu0 0.0
    %1260 = vmatprep.subr.mxu0 0.0
    %1261 = vmatpush1.msra.mxu0 0.0
    %1262 = vmatprep.subr.mxu0 0.0
    %1263 = vmatpush1.msra.mxu0 0.0
    %1264 = vmatprep.mubr.f32.mxu0 0.0
    %1265 = vmatmul.mubr.f32.gmra.mrb[0].mxu0 %v1192
    %v1266 = vpop.f32.mrb[0].mxu0
    %v1267 = vadd.f32 0.0, %v1266
    %v1268 = vpop.f32.mrb[0].mxu0
    %v1269 = vadd.f32 0.0, %v1268
    %1270 = vdwg.mxu0
    %1271 = vmatprep.subr.mxu0 %v72
    %1272 = vmatpush1.msra.mxu0 %v71
    %1273 = vmatprep.subr.mxu0 %v76
    %1274 = vmatpush1.msra.mxu0 %v75
    %1275 = vmatprep.subr.mxu0 %v80
    %1276 = vmatpush1.msra.mxu0 %v79
    %1277 = vmatprep.subr.mxu0 %v84
    %1278 = vmatpush1.msra.mxu0 %v83
    %1279 = vmatprep.subr.mxu0 %v88
    %1280 = vmatpush1.msra.mxu0 %v87
    %1281 = vmatprep.subr.mxu0 %v92
    %1282 = vmatpush1.msra.mxu0 %v91
    %1283 = vmatprep.subr.mxu0 %v96
    %1284 = vmatpush1.msra.mxu0 %v95
    %1285 = vmatprep.subr.mxu0 %v100
    %1286 = vmatpush1.msra.mxu0 %v99
    %1287 = vmatprep.subr.mxu0 %v104
    %1288 = vmatpush1.msra.mxu0 %v103
    %1289 = vmatprep.subr.mxu0 %v108
    %1290 = vmatpush1.msra.mxu0 %v107
    %1291 = vmatprep.subr.mxu0 %v112
    %1292 = vmatpush1.msra.mxu0 %v111
    %1293 = vmatprep.subr.mxu0 %v116
    %1294 = vmatpush1.msra.mxu0 %v115
    %1295 = vmatprep.subr.mxu0 %v120
    %1296 = vmatpush1.msra.mxu0 %v119
    %1297 = vmatprep.subr.mxu0 %v124
    %1298 = vmatpush1.msra.mxu0 %v123
    %1299 = vmatprep.subr.mxu0 %v128
    %1300 = vmatpush1.msra.mxu0 %v127
    %1301 = vmatprep.subr.mxu0 %v132
    %1302 = vmatpush1.msra.mxu0 %v131
    %1303 = vmatprep.subr.mxu0 0.0
    %1304 = vmatpush1.msra.mxu0 0.0
    %1305 = vmatprep.subr.mxu0 0.0
    %1306 = vmatpush1.msra.mxu0 0.0
    %1307 = vmatprep.subr.mxu0 0.0
    %1308 = vmatpush1.msra.mxu0 0.0
    %1309 = vmatprep.subr.mxu0 0.0
    %1310 = vmatpush1.msra.mxu0 0.0
    %1311 = vmatprep.subr.mxu0 0.0
    %1312 = vmatpush1.msra.mxu0 0.0
    %1313 = vmatprep.subr.mxu0 0.0
    %1314 = vmatpush1.msra.mxu0 0.0
    %1315 = vmatprep.subr.mxu0 0.0
    %1316 = vmatpush1.msra.mxu0 0.0
    %1317 = vmatprep.subr.mxu0 0.0
    %1318 = vmatpush1.msra.mxu0 0.0
    %1319 = vmatprep.subr.mxu0 0.0
    %1320 = vmatpush1.msra.mxu0 0.0
    %1321 = vmatprep.subr.mxu0 0.0
    %1322 = vmatpush1.msra.mxu0 0.0
    %1323 = vmatprep.subr.mxu0 0.0
    %1324 = vmatpush1.msra.mxu0 0.0
    %1325 = vmatprep.subr.mxu0 0.0
    %1326 = vmatpush1.msra.mxu0 0.0
    %1327 = vmatprep.subr.mxu0 0.0
    %1328 = vmatpush1.msra.mxu0 0.0
    %1329 = vmatprep.subr.mxu0 0.0
    %1330 = vmatpush1.msra.mxu0 0.0
    %1331 = vmatprep.subr.mxu0 0.0
    %1332 = vmatpush1.msra.mxu0 0.0
    %1333 = vmatprep.subr.mxu0 0.0
    %1334 = vmatpush1.msra.mxu0 0.0
    %1335 = vmatprep.mubr.f32.mxu0 0.0
    %1336 = vmatmul.mubr.f32.gmra.mrb[0].mxu0 %v1192
    %v1337 = vpop.f32.mrb[0].mxu0
    %v1338 = vadd.f32 0.0, %v1337
    %v1339 = vpop.f32.mrb[0].mxu0
    %v1340 = vadd.f32 0.0, %v1339
    %1341 = vdwg.mxu0
    %v1342 = vadd.f32 %v1196, %v1267
    %v1343 = vadd.f32 %v1197, %v1269
    %v1344 = vadd.f32 %v1198, %v1338
    %v1345 = vadd.f32 %v1199, %v1340
    %v1346 = vxor.u32 %v1342, 2147483648
    %v1347 = vmul.f32 %v1346, 1.442695
    %v1348 = vpow.pop %v1347
    %v1349 = vadd.f32 %v1348, 1.0
    %v1350 = vrcp.pop %v1349
    %v1351 = vmul.f32 1.0, %v1350
    %v1352 = vxor.u32 %v1343, 2147483648
    %v1353 = vmul.f32 %v1352, 1.442695
    %v1354 = vpow.pop %v1353
    %v1355 = vadd.f32 %v1354, 1.0
    %v1356 = vrcp.pop %v1355
    %v1357 = vmul.f32 1.0, %v1356
    %v1358 = vtanh.pop %v1344
    %v1359 = vxor.u32 %v1345, 2147483648
    %v1360 = vmul.f32 %v1359, 1.442695
    %v1361 = vpow.pop %v1360
    %v1362 = vadd.f32 %v1361, 1.0
    %v1363 = vrcp.pop %v1362
    %v1364 = vmul.f32 1.0, %v1363
    %v1365 = vmul.f32 %v1357, %v1190
    %v1366 = vmul.f32 %v1351, %v1358
    %v1367 = vadd.f32 %v1365, %v1366
    %v1368 = vtanh.pop %v1367
    %v1369 = vmul.f32 %v1364, %v1368
    %s1370 = scalar_lea.vmem [#allocation10], 48
    %1371 = vst [vmem:[%s1370] sm:$0xff] %v1369
    %s1372 = scalar_lea.vmem [#allocation4], 224
    %v1373 = vld [vmem:[%s1372] sm:$0xff]
    %v1374 = vld [vmem:[%s1372 + $0x8] sm:$0xff]
    %v1375 = vld [vmem:[%s1372 + $0x10] sm:$0xff]
    %v1376 = vld [vmem:[%s1372 + $0x18] sm:$0xff]
    %1377 = vmatprep.subr.mxu0 %v70
    %1378 = vmatpush1.msra.mxu0 %v69
    %1379 = vmatprep.subr.mxu0 %v74
    %1380 = vmatpush1.msra.mxu0 %v73
    %1381 = vmatprep.subr.mxu0 %v78
    %1382 = vmatpush1.msra.mxu0 %v77
    %1383 = vmatprep.subr.mxu0 %v82
    %1384 = vmatpush1.msra.mxu0 %v81
    %1385 = vmatprep.subr.mxu0 %v86
    %1386 = vmatpush1.msra.mxu0 %v85
    %1387 = vmatprep.subr.mxu0 %v90
    %1388 = vmatpush1.msra.mxu0 %v89
    %1389 = vmatprep.subr.mxu0 %v94
    %1390 = vmatpush1.msra.mxu0 %v93
    %1391 = vmatprep.subr.mxu0 %v98
    %1392 = vmatpush1.msra.mxu0 %v97
    %1393 = vmatprep.subr.mxu0 %v102
    %1394 = vmatpush1.msra.mxu0 %v101
    %1395 = vmatprep.subr.mxu0 %v106
    %1396 = vmatpush1.msra.mxu0 %v105
    %1397 = vmatprep.subr.mxu0 %v110
    %1398 = vmatpush1.msra.mxu0 %v109
    %1399 = vmatprep.subr.mxu0 %v114
    %1400 = vmatpush1.msra.mxu0 %v113
    %1401 = vmatprep.subr.mxu0 %v118
    %1402 = vmatpush1.msra.mxu0 %v117
    %1403 = vmatprep.subr.mxu0 %v122
    %1404 = vmatpush1.msra.mxu0 %v121
    %1405 = vmatprep.subr.mxu0 %v126
    %1406 = vmatpush1.msra.mxu0 %v125
    %1407 = vmatprep.subr.mxu0 %v130
    %1408 = vmatpush1.msra.mxu0 %v129
    %1409 = vmatprep.subr.mxu0 0.0
    %1410 = vmatpush1.msra.mxu0 0.0
    %1411 = vmatprep.subr.mxu0 0.0
    %1412 = vmatpush1.msra.mxu0 0.0
    %1413 = vmatprep.subr.mxu0 0.0
    %1414 = vmatpush1.msra.mxu0 0.0
    %1415 = vmatprep.subr.mxu0 0.0
    %1416 = vmatpush1.msra.mxu0 0.0
    %1417 = vmatprep.subr.mxu0 0.0
    %1418 = vmatpush1.msra.mxu0 0.0
    %1419 = vmatprep.subr.mxu0 0.0
    %1420 = vmatpush1.msra.mxu0 0.0
    %1421 = vmatprep.subr.mxu0 0.0
    %1422 = vmatpush1.msra.mxu0 0.0
    %1423 = vmatprep.subr.mxu0 0.0
    %1424 = vmatpush1.msra.mxu0 0.0
    %1425 = vmatprep.subr.mxu0 0.0
    %1426 = vmatpush1.msra.mxu0 0.0
    %1427 = vmatprep.subr.mxu0 0.0
    %1428 = vmatpush1.msra.mxu0 0.0
    %1429 = vmatprep.subr.mxu0 0.0
    %1430 = vmatpush1.msra.mxu0 0.0
    %1431 = vmatprep.subr.mxu0 0.0
    %1432 = vmatpush1.msra.mxu0 0.0
    %1433 = vmatprep.subr.mxu0 0.0
    %1434 = vmatpush1.msra.mxu0 0.0
    %1435 = vmatprep.subr.mxu0 0.0
    %1436 = vmatpush1.msra.mxu0 0.0
    %1437 = vmatprep.subr.mxu0 0.0
    %1438 = vmatpush1.msra.mxu0 0.0
    %1439 = vmatprep.subr.mxu0 0.0
    %1440 = vmatpush1.msra.mxu0 0.0
    %1441 = vmatprep.mubr.f32.mxu0 0.0
    %1442 = vmatmul.mubr.f32.gmra.mrb[0].mxu0 %v1369
    %v1443 = vpop.f32.mrb[0].mxu0
    %v1444 = vadd.f32 0.0, %v1443
    %v1445 = vpop.f32.mrb[0].mxu0
    %v1446 = vadd.f32 0.0, %v1445
    %1447 = vdwg.mxu0
    %1448 = vmatprep.subr.mxu0 %v72
    %1449 = vmatpush1.msra.mxu0 %v71
    %1450 = vmatprep.subr.mxu0 %v76
    %1451 = vmatpush1.msra.mxu0 %v75
    %1452 = vmatprep.subr.mxu0 %v80
    %1453 = vmatpush1.msra.mxu0 %v79
    %1454 = vmatprep.subr.mxu0 %v84
    %1455 = vmatpush1.msra.mxu0 %v83
    %1456 = vmatprep.subr.mxu0 %v88
    %1457 = vmatpush1.msra.mxu0 %v87
    %1458 = vmatprep.subr.mxu0 %v92
    %1459 = vmatpush1.msra.mxu0 %v91
    %1460 = vmatprep.subr.mxu0 %v96
    %1461 = vmatpush1.msra.mxu0 %v95
    %1462 = vmatprep.subr.mxu0 %v100
    %1463 = vmatpush1.msra.mxu0 %v99
    %1464 = vmatprep.subr.mxu0 %v104
    %1465 = vmatpush1.msra.mxu0 %v103
    %1466 = vmatprep.subr.mxu0 %v108
    %1467 = vmatpush1.msra.mxu0 %v107
    %1468 = vmatprep.subr.mxu0 %v112
    %1469 = vmatpush1.msra.mxu0 %v111
    %1470 = vmatprep.subr.mxu0 %v116
    %1471 = vmatpush1.msra.mxu0 %v115
    %1472 = vmatprep.subr.mxu0 %v120
    %1473 = vmatpush1.msra.mxu0 %v119
    %1474 = vmatprep.subr.mxu0 %v124
    %1475 = vmatpush1.msra.mxu0 %v123
    %1476 = vmatprep.subr.mxu0 %v128
    %1477 = vmatpush1.msra.mxu0 %v127
    %1478 = vmatprep.subr.mxu0 %v132
    %1479 = vmatpush1.msra.mxu0 %v131
    %1480 = vmatprep.subr.mxu0 0.0
    %1481 = vmatpush1.msra.mxu0 0.0
    %1482 = vmatprep.subr.mxu0 0.0
    %1483 = vmatpush1.msra.mxu0 0.0
    %1484 = vmatprep.subr.mxu0 0.0
    %1485 = vmatpush1.msra.mxu0 0.0
    %1486 = vmatprep.subr.mxu0 0.0
    %1487 = vmatpush1.msra.mxu0 0.0
    %1488 = vmatprep.subr.mxu0 0.0
    %1489 = vmatpush1.msra.mxu0 0.0
    %1490 = vmatprep.subr.mxu0 0.0
    %1491 = vmatpush1.msra.mxu0 0.0
    %1492 = vmatprep.subr.mxu0 0.0
    %1493 = vmatpush1.msra.mxu0 0.0
    %1494 = vmatprep.subr.mxu0 0.0
    %1495 = vmatpush1.msra.mxu0 0.0
    %1496 = vmatprep.subr.mxu0 0.0
    %1497 = vmatpush1.msra.mxu0 0.0
    %1498 = vmatprep.subr.mxu0 0.0
    %1499 = vmatpush1.msra.mxu0 0.0
    %1500 = vmatprep.subr.mxu0 0.0
    %1501 = vmatpush1.msra.mxu0 0.0
    %1502 = vmatprep.subr.mxu0 0.0
    %1503 = vmatpush1.msra.mxu0 0.0
    %1504 = vmatprep.subr.mxu0 0.0
    %1505 = vmatpush1.msra.mxu0 0.0
    %1506 = vmatprep.subr.mxu0 0.0
    %1507 = vmatpush1.msra.mxu0 0.0
    %1508 = vmatprep.subr.mxu0 0.0
    %1509 = vmatpush1.msra.mxu0 0.0
    %1510 = vmatprep.subr.mxu0 0.0
    %1511 = vmatpush1.msra.mxu0 0.0
    %1512 = vmatprep.mubr.f32.mxu0 0.0
    %1513 = vmatmul.mubr.f32.gmra.mrb[0].mxu0 %v1369
    %v1514 = vpop.f32.mrb[0].mxu0
    %v1515 = vadd.f32 0.0, %v1514
    %v1516 = vpop.f32.mrb[0].mxu0
    %v1517 = vadd.f32 0.0, %v1516
    %1518 = vdwg.mxu0
    %v1519 = vadd.f32 %v1373, %v1444
    %v1520 = vadd.f32 %v1374, %v1446
    %v1521 = vadd.f32 %v1375, %v1515
    %v1522 = vadd.f32 %v1376, %v1517
    %v1523 = vxor.u32 %v1519, 2147483648
    %v1524 = vmul.f32 %v1523, 1.442695
    %v1525 = vpow.pop %v1524
    %v1526 = vadd.f32 %v1525, 1.0
    %v1527 = vrcp.pop %v1526
    %v1528 = vmul.f32 1.0, %v1527
    %v1529 = vxor.u32 %v1520, 2147483648
    %v1530 = vmul.f32 %v1529, 1.442695
    %v1531 = vpow.pop %v1530
    %v1532 = vadd.f32 %v1531, 1.0
    %v1533 = vrcp.pop %v1532
    %v1534 = vmul.f32 1.0, %v1533
    %v1535 = vtanh.pop %v1521
    %v1536 = vxor.u32 %v1522, 2147483648
    %v1537 = vmul.f32 %v1536, 1.442695
    %v1538 = vpow.pop %v1537
    %v1539 = vadd.f32 %v1538, 1.0
    %v1540 = vrcp.pop %v1539
    %v1541 = vmul.f32 1.0, %v1540
    %v1542 = vmul.f32 %v1534, %v1367
    %v1543 = vmul.f32 %v1528, %v1535
    %v1544 = vadd.f32 %v1542, %v1543
    %v1545 = vtanh.pop %v1544
    %v1546 = vmul.f32 %v1541, %v1545
    %s1547 = scalar_lea.vmem [#allocation10], 56
    %1548 = vst [vmem:[%s1547] sm:$0xff] %v1546
    %1549 = vst [vmem:[#allocation2] sm:$0xff] %v1546
    %1550 = vst [vmem:[#allocation3] sm:$0xff] %v1544
    // Predicated region
    $region34: #{tpu_custom_call.1} parent=1 // pred_check
      %p1551 = pneg %p61
    $region35: #{tpu_custom_call.1} parent=1 // pred_check_branch
      %1553 = sbr.rel (%p1551) target = $region37
    $region36: #{tpu_custom_call.1} parent=1 // pred_region
      %1554 = vst [vmem:[#allocation11] sm:$0xff] %v1546
      %1555 = vst [vmem:[#allocation13] sm:$0xff] %v1544
    $region37: #{tpu_custom_call.1} parent=1 // pred_fallthru
      _
    // Predicated region
    $region38: #{tpu_custom_call.1} parent=1 // pred_check
      _
    $region39: #{tpu_custom_call.1} parent=1 // pred_check_branch
      %1557 = sbr.rel (0) target = $region41
    $region40: #{tpu_custom_call.1} parent=1 // pred_region
      %s1559 = ssub.s32 1024, 1024
      %1560 = vsyncadd [#allocation6], %s1559
      %s1561 = sshll.u32 [#allocation10], 4
      %s1562 = int_to_ptr.vmem [resolvable:$true] %s1561
      %1567 = dma.vmem_to_hbm [thread:$0]  %s1562, 1024, %s4, [#allocation6], 128, 128, 8
    $region41: #{tpu_custom_call.1} parent=1 // pred_fallthru
      _
    // Predicated region
    $region42: #{tpu_custom_call.1} parent=1 // pred_check
      _
    $region43: #{tpu_custom_call.1} parent=1 // pred_check_branch
      %1569 = sbr.rel (0) target = $region45
    $region44: #{tpu_custom_call.1} parent=1 // pred_region
      %s1571 = ssub.s32 128, 128
      %1572 = vsyncadd [#allocation12], %s1571
      %s1574 = sshll.u32 [#allocation11], 4
      %s1575 = int_to_ptr.vmem [resolvable:$true] %s1574
      %1577 = dma.vmem_to_hbm [thread:$0]  %s1575, 128, %s5, [#allocation12]
    $region45: #{tpu_custom_call.1} parent=1 // pred_fallthru
      _
    // Predicated region
    $region46: #{tpu_custom_call.1} parent=1 // pred_check
      _
    $region47: #{tpu_custom_call.1} parent=1 // pred_check_branch
      %1579 = sbr.rel (0) target = $region49
    $region48: #{tpu_custom_call.1} parent=1 // pred_region
      %s1581 = ssub.s32 128, 128
      %1582 = vsyncadd [#allocation12], %s1581
      %s1584 = sshll.u32 [#allocation13], 4
      %s1585 = int_to_ptr.vmem [resolvable:$true] %s1584
      %1587 = dma.vmem_to_hbm [thread:$0]  %s1585, 128, %s6, [#allocation12]
    $region49: #{tpu_custom_call.1} parent=1 // pred_fallthru
      _
    // Predicated region
    $region50: #{tpu_custom_call.1} parent=1 // pred_check
      _
    $region51: #{tpu_custom_call.1} parent=1 // pred_check_branch
      %1589 = sbr.rel (0) target = $region53
    $region52: #{tpu_custom_call.1} parent=1 // pred_region
      %1590 = dma.done [#allocation6], 1024
    $region53: #{tpu_custom_call.1} parent=1 // pred_fallthru
      _
    // Predicated region
    $region54: #{tpu_custom_call.1} parent=1 // pred_check
      _
    $region55: #{tpu_custom_call.1} parent=1 // pred_check_branch
      %1592 = sbr.rel (0) target = $region57
    $region56: #{tpu_custom_call.1} parent=1 // pred_region
      %1593 = dma.done [#allocation12], 128
    $region57: #{tpu_custom_call.1} parent=1 // pred_fallthru
      _
    // Predicated region
    $region58: #{tpu_custom_call.1} parent=1 // pred_check
      _
    $region59: #{tpu_custom_call.1} parent=1 // pred_check_branch
      %1595 = sbr.rel (0) target = $region61
    $region60: #{tpu_custom_call.1} parent=1 // pred_region
      %1596 = dma.done [#allocation12], 128
    $region61: #{tpu_custom_call.1} parent=1 // pred_fallthru
      _
    %1597 = vsyncpa [#allocation5], 1
    %1598 = vsyncpa [#allocation8], 1
    %1599 = vsyncpa [#allocation6], 1
    %1600 = vsyncpa [#allocation12], 1

</llo_original>
